<compile_context>
chip_gen: v7x
topology: tpu7x:2x2x1
jax: 0.10.0
libtpu: 0.0.40
codegen_flags: <defaults>
</compile_context>

<pallas_src>
import jax
import jax.numpy as jnp
from jax.experimental import pallas as pl
from jax.experimental.pallas import tpu as pltpu

LANE = 128
SUBLANE = 8


def _round_up(x, m):
    return ((x + m - 1) // m) * m


def _cdiv(a, b):
    return -(-a // b)


def mlp_kernel(x_ref, w1_ref, b1_ref, w2_ref, b2_ref, w3_ref, b3_ref, o_ref):
    # x arrives in its producer dtype (f32 here); cast to bf16 just before the
    # MXU op -- the VPU cast is hidden under the x DMA.
    x = x_ref[...].astype(jnp.bfloat16)
    # fc1 + ReLU (bf16 operands, f32 accumulation on the MXU; bias/ReLU in f32)
    h1 = jnp.dot(x, w1_ref[...], preferred_element_type=jnp.float32)
    h1 = jnp.maximum(h1 + b1_ref[...], 0.0)
    # fc2 + ReLU
    h2 = jnp.dot(h1.astype(jnp.bfloat16), w2_ref[...],
                 preferred_element_type=jnp.float32)
    h2 = jnp.maximum(h2 + b2_ref[...], 0.0)
    # fc3 (output lane-padded to 128 columns; padding weights/bias are zero)
    out = jnp.dot(h2.astype(jnp.bfloat16), w3_ref[...],
                  preferred_element_type=jnp.float32) + b3_ref[...]
    o_ref[...] = out.astype(o_ref.dtype)   # bf16 store: lane-dense, half the bytes


def prepare_params(params):
    """One-time prep: transpose to (in, out), cast to bf16, lane-pad fc3 to 128."""
    w1 = params["w1"].T.astype(jnp.bfloat16)                 # (in_dim, 128)
    w2 = params["w2"].T.astype(jnp.bfloat16)                 # (128, 128)
    w3 = params["w3"].T.astype(jnp.float32)                  # (128, num_classes)
    num_classes = w3.shape[1]
    nc_pad = _round_up(max(num_classes, LANE), LANE)
    w3p = jnp.zeros((w3.shape[0], nc_pad), jnp.float32).at[:, :num_classes].set(w3)
    b3p = jnp.zeros((1, nc_pad), jnp.float32).at[:, :num_classes].set(
        params["b3"].reshape(1, -1))
    return {
        "w1": w1,
        "b1": params["b1"].reshape(1, -1).astype(jnp.float32),
        "w2": w2,
        "b2": params["b2"].reshape(1, -1).astype(jnp.float32),
        "w3": w3p.astype(jnp.bfloat16),
        "b3": b3p,
        "num_classes": num_classes,
    }


def _tile_plan(B):
    """Pick (tm, grid_m, vmem_limit_bytes), gated on the chip's VMEM capacity."""
    vmem_cap = 64 << 20  # conservative default (v7x-class) if query fails
    try:
        vmem_cap = int(pltpu.get_tpu_info().vmem_capacity_bytes)
    except Exception:
        pass
    if vmem_cap <= (64 << 20):
        # v7x-class: 64 MiB VMEM per TC, 2 TensorCores per chip.
        tm_cap, vmem_limit, n_cores = 512, 28 << 20, 2
    else:
        # v5e / v6e: 128 MiB VMEM, single TensorCore.
        tm_cap, vmem_limit, n_cores = 1024, 56 << 20, 1

    tm = min(tm_cap, _round_up(B, SUBLANE))
    if n_cores > 1 and B >= 2 * SUBLANE:
        # Guarantee >= n_cores grid steps so both TensorCores get work.
        tm = min(tm, _round_up(_cdiv(B, n_cores), SUBLANE))
    b_pad = _round_up(B, tm)
    return tm, b_pad // tm, vmem_limit


def mlp_forward(x_nchw, prepped):
    """x_nchw: (B, C, H, W). prepped: output of prepare_params()."""
    B = x_nchw.shape[0]
    x_flat = x_nchw.reshape(B, -1)                # same order as torch .view(B, -1)
    in_dim = x_flat.shape[1]
    nc_pad = prepped["w3"].shape[1]
    num_classes = prepped["num_classes"]

    tm, grid_m, vmem_limit = _tile_plan(B)
    b_pad = tm * grid_m
    # No wrapper-side cast: x goes in at its native dtype (cast to bf16 in-kernel).
    # Pad only the remainder rows, and only when needed.
    if b_pad != B:
        x_flat = jnp.pad(x_flat, ((0, b_pad - B), (0, 0)))

    # Weights/biases map to block (0, 0) every step -> single-buffer them.
    const = lambda shape: pl.BlockSpec(shape, lambda i: (0, 0),
                                       pipeline_mode=pl.Buffered(1))
    # x is the DMA-bound stream; give it a third buffer when the grid is long
    # enough to benefit.
    if grid_m >= 3:
        x_spec = pl.BlockSpec((tm, in_dim), lambda i: (i, 0),
                              pipeline_mode=pl.Buffered(3))
    else:
        x_spec = pl.BlockSpec((tm, in_dim), lambda i: (i, 0))

    out = pl.pallas_call(
        mlp_kernel,
        out_shape=jax.ShapeDtypeStruct((b_pad, nc_pad), jnp.bfloat16),
        grid=(grid_m,),
        in_specs=[
            x_spec,                                           # x tiles pipeline over M
            const(prepped["w1"].shape),                       # weights stay VMEM-resident
            const(prepped["b1"].shape),
            const(prepped["w2"].shape),
            const(prepped["b2"].shape),
            const(prepped["w3"].shape),
            const(prepped["b3"].shape),
        ],
        out_specs=pl.BlockSpec((tm, nc_pad), lambda i: (i, 0)),
        compiler_params=pltpu.CompilerParams(
            dimension_semantics=("parallel",),
            vmem_limit_bytes=vmem_limit,
        ),
    )(x_flat, prepped["w1"], prepped["b1"], prepped["w2"], prepped["b2"],
      prepped["w3"], prepped["b3"])
    # Slice away batch/lane padding; upcast the (small) bf16 logit slab to f32.
    return out[:B, :num_classes].astype(jnp.float32)


def init_params(key, channel, num_classes, res=32):
    """Deterministic init mirroring nn.Linear default (uniform +/- 1/sqrt(fan_in))."""
    in_dim = 28 * 28 * 1 if channel == 1 else res * res * 3
    dims = [(in_dim, 128), (128, 128), (128, num_classes)]
    params = {}
    for i, (fan_in, fan_out) in enumerate(dims, start=1):
        key, kw, kb = jax.random.split(key, 3)
        bound = 1.0 / jnp.sqrt(fan_in)
        # PyTorch weight layout: (out_features, in_features)
        params[f"w{i}"] = jax.random.uniform(
            kw, (fan_out, fan_in), jnp.float32, minval=-bound, maxval=bound)
        params[f"b{i}"] = jax.random.uniform(
            kb, (fan_out,), jnp.float32, minval=-bound, maxval=bound)
    return params


def mlp_reference_f32(x_nchw, params):
    """Pure-JAX f32 reference replicating the PyTorch forward exactly."""
    B = x_nchw.shape[0]
    out = x_nchw.reshape(B, -1)
    out = jax.nn.relu(out @ params["w1"].T + params["b1"])
    out = jax.nn.relu(out @ params["w2"].T + params["b2"])
    out = out @ params["w3"].T + params["b3"]
    return out


def mlp_reference_bf16(x_nchw, params):
    """Same computation as the kernel (bf16 operands, f32 accumulation)."""
    B = x_nchw.shape[0]
    h = x_nchw.reshape(B, -1).astype(jnp.bfloat16)
    w1 = params["w1"].T.astype(jnp.bfloat16)
    w2 = params["w2"].T.astype(jnp.bfloat16)
    w3 = params["w3"].T.astype(jnp.bfloat16)
    h1 = jax.nn.relu(jnp.dot(h, w1, preferred_element_type=jnp.float32)
                     + params["b1"])
    h2 = jax.nn.relu(jnp.dot(h1.astype(jnp.bfloat16), w2,
                             preferred_element_type=jnp.float32) + params["b2"])
    return jnp.dot(h2.astype(jnp.bfloat16), w3,
                   preferred_element_type=jnp.float32) + params["b3"]


if __name__ == "__main__":
    key = jax.random.PRNGKey(0)
    k_param, k_x = jax.random.split(key)

    channel, num_classes, res = 3, 10, 32
    batch = 4

    params = init_params(k_param, channel, num_classes, res)
    prepped = prepare_params(params)                      # one-time weight prep
    x = jax.random.normal(k_x, (batch, channel, res, res), jnp.float32)  # NCHW

    y = mlp_forward(x, prepped)
    y = jax.block_until_ready(y)

    assert y.shape == (batch, num_classes)
    # Precision-matched reference (bf16 operands, f32 accumulation); tolerance
    # widened slightly to cover the bf16 rounding of the stored logits.
    y_ref_bf16 = mlp_reference_bf16(x, params)
    assert jnp.allclose(y, y_ref_bf16, atol=2e-2, rtol=2e-2), "mismatch vs bf16 reference"
    # Loose sanity check against the exact f32 PyTorch-equivalent math.
    y_ref_f32 = mlp_reference_f32(x, params)
    assert jnp.allclose(y, y_ref_f32, atol=1e-1, rtol=1e-1), "mismatch vs f32 reference"

    print("KERNEL_OK")
</pallas_src>

<mosaic_0001>
module attributes {stable_mosaic.version = 11 : i64} {
  func.func @mlp_kernel(%arg0: i32, %arg1: memref<8x3072xf32, #tpu.memory_space<vmem>>, %arg2: memref<3072x128xbf16, #tpu.memory_space<vmem>>, %arg3: memref<1x128xf32, #tpu.memory_space<vmem>>, %arg4: memref<128x128xbf16, #tpu.memory_space<vmem>>, %arg5: memref<1x128xf32, #tpu.memory_space<vmem>>, %arg6: memref<128x128xbf16, #tpu.memory_space<vmem>>, %arg7: memref<1x128xf32, #tpu.memory_space<vmem>>, %arg8: memref<8x128xbf16, #tpu.memory_space<vmem>>) attributes {dimension_semantics = [#tpu.dimension_semantics<parallel>], iteration_bounds = array<i64: 1>, scalar_prefetch = 0 : i64, scratch_operands = 0 : i64, tpu.core_type = #tpu.core_type<tc>, window_params = [{transform_indices = @transform_0, window_bounds = array<i64: 8, 3072>}, {pipeline_mode = #tpu.pipeline_mode<synchronous>, transform_indices = @transform_1, window_bounds = array<i64: 3072, 128>}, {pipeline_mode = #tpu.pipeline_mode<synchronous>, transform_indices = @transform_2, window_bounds = array<i64: 1, 128>}, {pipeline_mode = #tpu.pipeline_mode<synchronous>, transform_indices = @transform_3, window_bounds = array<i64: 128, 128>}, {pipeline_mode = #tpu.pipeline_mode<synchronous>, transform_indices = @transform_4, window_bounds = array<i64: 1, 128>}, {pipeline_mode = #tpu.pipeline_mode<synchronous>, transform_indices = @transform_5, window_bounds = array<i64: 128, 128>}, {pipeline_mode = #tpu.pipeline_mode<synchronous>, transform_indices = @transform_6, window_bounds = array<i64: 1, 128>}, {transform_indices = @transform_7, window_bounds = array<i64: 8, 128>}]} {
    %c0 = arith.constant 0 : index
    %c0_0 = arith.constant 0 : index
    %0 = vector.load %arg1[%c0, %c0_0] : memref<8x3072xf32, #tpu.memory_space<vmem>>, vector<8x3072xf32>
    %1 = arith.truncf %0 : vector<8x3072xf32> to vector<8x3072xbf16>
    %c0_1 = arith.constant 0 : index
    %c0_2 = arith.constant 0 : index
    %2 = vector.load %arg2[%c0_1, %c0_2] : memref<3072x128xbf16, #tpu.memory_space<vmem>>, vector<3072x128xbf16>
    %cst = arith.constant dense<0.000000e+00> : vector<8x128xf32>
    %3 = tpu.matmul %1, %2, %cst {dimension_numbers = #tpu.dot_dimension_numbers<[1], [0], [0], [1], [0, 0, 1, 1], [], []>} : vector<8x3072xbf16>, vector<3072x128xbf16>, vector<8x128xf32> -> vector<8x128xf32>
    %c0_3 = arith.constant 0 : index
    %c0_4 = arith.constant 0 : index
    %4 = vector.load %arg3[%c0_3, %c0_4] : memref<1x128xf32, #tpu.memory_space<vmem>>, vector<1x128xf32>
    %5 = vector.broadcast %4 : vector<1x128xf32> to vector<8x128xf32>
    %6 = arith.addf %3, %5 : vector<8x128xf32>
    %cst_5 = arith.constant 0.000000e+00 : f32
    %7 = vector.broadcast %cst_5 : f32 to vector<8x128xf32>
    %8 = arith.maximumf %6, %7 : vector<8x128xf32>
    %9 = arith.truncf %8 : vector<8x128xf32> to vector<8x128xbf16>
    %c0_6 = arith.constant 0 : index
    %c0_7 = arith.constant 0 : index
    %10 = vector.load %arg4[%c0_6, %c0_7] : memref<128x128xbf16, #tpu.memory_space<vmem>>, vector<128x128xbf16>
    %cst_8 = arith.constant dense<0.000000e+00> : vector<8x128xf32>
    %11 = tpu.matmul %9, %10, %cst_8 {dimension_numbers = #tpu.dot_dimension_numbers<[1], [0], [0], [1], [0, 0, 1, 1], [], []>} : vector<8x128xbf16>, vector<128x128xbf16>, vector<8x128xf32> -> vector<8x128xf32>
    %c0_9 = arith.constant 0 : index
    %c0_10 = arith.constant 0 : index
    %12 = vector.load %arg5[%c0_9, %c0_10] : memref<1x128xf32, #tpu.memory_space<vmem>>, vector<1x128xf32>
    %13 = vector.broadcast %12 : vector<1x128xf32> to vector<8x128xf32>
    %14 = arith.addf %11, %13 : vector<8x128xf32>
    %cst_11 = arith.constant 0.000000e+00 : f32
    %15 = vector.broadcast %cst_11 : f32 to vector<8x128xf32>
    %16 = arith.maximumf %14, %15 : vector<8x128xf32>
    %17 = arith.truncf %16 : vector<8x128xf32> to vector<8x128xbf16>
    %c0_12 = arith.constant 0 : index
    %c0_13 = arith.constant 0 : index
    %18 = vector.load %arg6[%c0_12, %c0_13] : memref<128x128xbf16, #tpu.memory_space<vmem>>, vector<128x128xbf16>
    %cst_14 = arith.constant dense<0.000000e+00> : vector<8x128xf32>
    %19 = tpu.matmul %17, %18, %cst_14 {dimension_numbers = #tpu.dot_dimension_numbers<[1], [0], [0], [1], [0, 0, 1, 1], [], []>} : vector<8x128xbf16>, vector<128x128xbf16>, vector<8x128xf32> -> vector<8x128xf32>
    %c0_15 = arith.constant 0 : index
    %c0_16 = arith.constant 0 : index
    %20 = vector.load %arg7[%c0_15, %c0_16] : memref<1x128xf32, #tpu.memory_space<vmem>>, vector<1x128xf32>
    %21 = vector.broadcast %20 : vector<1x128xf32> to vector<8x128xf32>
    %22 = arith.addf %19, %21 : vector<8x128xf32>
    %23 = arith.truncf %22 : vector<8x128xf32> to vector<8x128xbf16>
    %c0_17 = arith.constant 0 : index
    %c0_18 = arith.constant 0 : index
    %24 = vector.load %arg8[%c0_17, %c0_18] : memref<8x128xbf16, #tpu.memory_space<vmem>>, vector<8x128xbf16>
    tpu.vector_store %arg8[%c0_17, %c0_18], %23 {strides = array<i32>} : memref<8x128xbf16, #tpu.memory_space<vmem>>, vector<8x128xbf16>,
    return
  }
  func.func @transform_0(%arg0: i32) -> (i32, i32) {
    %c0_i32 = arith.constant 0 : i32
    %c0_i32_0 = arith.constant 0 : i32
    return %arg0, %c0_i32 : i32, i32
  }
  func.func @transform_1(%arg0: i32) -> (i32, i32) {
    %c0_i32 = arith.constant 0 : i32
    %c0_i32_0 = arith.constant 0 : i32
    %c0_i32_1 = arith.constant 0 : i32
    return %c0_i32, %c0_i32_0 : i32, i32
  }
  func.func @transform_2(%arg0: i32) -> (i32, i32) {
    %c0_i32 = arith.constant 0 : i32
    %c0_i32_0 = arith.constant 0 : i32
    %c0_i32_1 = arith.constant 0 : i32
    return %c0_i32, %c0_i32_0 : i32, i32
  }
  func.func @transform_3(%arg0: i32) -> (i32, i32) {
    %c0_i32 = arith.constant 0 : i32
    %c0_i32_0 = arith.constant 0 : i32
    %c0_i32_1 = arith.constant 0 : i32
    return %c0_i32, %c0_i32_0 : i32, i32
  }
  func.func @transform_4(%arg0: i32) -> (i32, i32) {
    %c0_i32 = arith.constant 0 : i32
    %c0_i32_0 = arith.constant 0 : i32
    %c0_i32_1 = arith.constant 0 : i32
    return %c0_i32, %c0_i32_0 : i32, i32
  }
  func.func @transform_5(%arg0: i32) -> (i32, i32) {
    %c0_i32 = arith.constant 0 : i32
    %c0_i32_0 = arith.constant 0 : i32
    %c0_i32_1 = arith.constant 0 : i32
    return %c0_i32, %c0_i32_0 : i32, i32
  }
  func.func @transform_6(%arg0: i32) -> (i32, i32) {
    %c0_i32 = arith.constant 0 : i32
    %c0_i32_0 = arith.constant 0 : i32
    %c0_i32_1 = arith.constant 0 : i32
    return %c0_i32, %c0_i32_0 : i32, i32
  }
  func.func @transform_7(%arg0: i32) -> (i32, i32) {
    %c0_i32 = arith.constant 0 : i32
    %c0_i32_0 = arith.constant 0 : i32
    return %arg0, %c0_i32 : i32, i32
  }
}

</mosaic_0001>

<llo_original>
// kernel: tpu_custom_call.1
$region0: #{tpu_custom_call.1}
  #allocation0 [shape = 'u32[]', space=smem, size = 0x4, offset = 0x4, fixed_abs, tag = 'smem constant byte address 0x4 - core index']
  #allocation1 [shape = 'u32[144,128]{1,0:T(1,128)}', space=vmem, size = 0x12000, scoped, tag = 'internal scratch']
  %s0 = inlined_call_operand.hbm [shape: f32[8,3072], index: 0, kind: input, shape index: {}]
  %s1 = inlined_call_operand.hbm [shape: bf16[3072,128], index: 1, kind: input, shape index: {}]
  %s2 = inlined_call_operand.vmem [shape: f32[1,128], index: 2, kind: input, shape index: {}]
  %s3 = inlined_call_operand.hbm [shape: bf16[128,128], index: 3, kind: input, shape index: {}]
  %s4 = inlined_call_operand.vmem [shape: f32[1,128], index: 4, kind: input, shape index: {}]
  %s5 = inlined_call_operand.hbm [shape: bf16[128,128], index: 5, kind: input, shape index: {}]
  %s6 = inlined_call_operand.vmem [shape: f32[1,128], index: 6, kind: input, shape index: {}]
  %s7 = inlined_call_operand.hbm [shape: bf16[8,128], index: 7, kind: output, shape index: {}]
  %s8 = sld [smem:[#allocation0]]
  $region54: #{tpu_custom_call.1} parent=0
    _
  %s10 = ssub.s32 1, %s8
  %s11 = scalar_select 0, %s10, %s8
  $region1: #{tpu_custom_call.1} parent=0
    #allocation2 [shape = 'u8[98304]{0}', space=vmem, size = 0x18000, scoped, tag = 'input window, operand 0, single buffered']
    #allocation3 [shape = 's32[1]{0}', space=sflag, size = 0x4, scoped, tag = 'scoped memory for tpu_custom_call.1']
    #allocation4 [shape = 's32[1]{0}', space=sflag, size = 0x4, scoped, tag = 'scoped memory for tpu_custom_call.1']
    #allocation5 [shape = 'u8[786432]{0}', space=vmem, size = 0xc0000, scoped, tag = 'input window, operand 1, single buffered']
    #allocation6 [shape = 's32[1]{0}', space=sflag, size = 0x4, scoped, tag = 'scoped memory for tpu_custom_call.1']
    #allocation7 [shape = 'u8[32768]{0}', space=vmem, size = 0x8000, scoped, tag = 'input window, operand 3, single buffered']
    #allocation8 [shape = 'u8[32768]{0}', space=vmem, size = 0x8000, scoped, tag = 'input window, operand 5, single buffered']
    #allocation9 [shape = 's32[1]{0}', space=sflag, size = 0x4, scoped, tag = 'scoped memory for tpu_custom_call.1']
    #allocation10 [shape = 'u8[2048]{0}', space=vmem, size = 0x800, scoped, tag = 'output window, operand 0, single buffered']
    %12 = vsyncpa [#allocation3], 0
    %13 = vsyncpa [#allocation6], 0
    %14 = vsyncpa [#allocation9], 0
    %15 = vsyncpa [#allocation4], 0
    // Predicated region
    $region2: #{tpu_custom_call.1} parent=1 // pred_check
      _
    $region3: #{tpu_custom_call.1} parent=1 // pred_check_branch
      %17 = sbr.rel (0) target = $region5
    $region4: #{tpu_custom_call.1} parent=1 // pred_region
      %s19 = ssub.s32 3072, 3072
      %20 = vsyncadd [#allocation3], %s19
      %s22 = sshll.u32 [#allocation2], 4
      %s23 = int_to_ptr.vmem [resolvable:$true] %s22
      %25 = dma.hbm_to_vmem [thread:$0]  %s0, 3072, %s23, [#allocation3]
    $region5: #{tpu_custom_call.1} parent=1 // pred_fallthru
      _
    // Predicated region
    $region6: #{tpu_custom_call.1} parent=1 // pred_check
      _
    $region7: #{tpu_custom_call.1} parent=1 // pred_check_branch
      %27 = sbr.rel (0) target = $region9
    $region8: #{tpu_custom_call.1} parent=1 // pred_region
      %s29 = ssub.s32 24576, 24576
      %30 = vsyncadd [#allocation6], %s29
      %s31 = sshll.u32 [#allocation5], 4
      %s32 = int_to_ptr.vmem [resolvable:$true] %s31
      %37 = dma.hbm_to_vmem [thread:$0]  %s1, 24576, %s32, [#allocation6], 64, 64, 4
    $region9: #{tpu_custom_call.1} parent=1 // pred_fallthru
      _
    // Predicated region
    $region10: #{tpu_custom_call.1} parent=1 // pred_check
      _
    $region11: #{tpu_custom_call.1} parent=1 // pred_check_branch
      %39 = sbr.rel (0) target = $region13
    $region12: #{tpu_custom_call.1} parent=1 // pred_region
      _
    $region13: #{tpu_custom_call.1} parent=1 // pred_fallthru
      _
    // Predicated region
    $region14: #{tpu_custom_call.1} parent=1 // pred_check
      _
    $region15: #{tpu_custom_call.1} parent=1 // pred_check_branch
      %41 = sbr.rel (0) target = $region17
    $region16: #{tpu_custom_call.1} parent=1 // pred_region
      %s43 = ssub.s32 1024, 1024
      %44 = vsyncadd [#allocation6], %s43
      %s45 = sshll.u32 [#allocation7], 4
      %s46 = int_to_ptr.vmem [resolvable:$true] %s45
      %51 = dma.hbm_to_vmem [thread:$0]  %s3, 1024, %s46, [#allocation6], 64, 64, 4
    $region17: #{tpu_custom_call.1} parent=1 // pred_fallthru
      _
    // Predicated region
    $region18: #{tpu_custom_call.1} parent=1 // pred_check
      _
    $region19: #{tpu_custom_call.1} parent=1 // pred_check_branch
      %53 = sbr.rel (0) target = $region21
    $region20: #{tpu_custom_call.1} parent=1 // pred_region
      _
    $region21: #{tpu_custom_call.1} parent=1 // pred_fallthru
      _
    // Predicated region
    $region22: #{tpu_custom_call.1} parent=1 // pred_check
      _
    $region23: #{tpu_custom_call.1} parent=1 // pred_check_branch
      %55 = sbr.rel (0) target = $region25
    $region24: #{tpu_custom_call.1} parent=1 // pred_region
      %s57 = ssub.s32 1024, 1024
      %58 = vsyncadd [#allocation9], %s57
      %s59 = sshll.u32 [#allocation8], 4
      %s60 = int_to_ptr.vmem [resolvable:$true] %s59
      %65 = dma.hbm_to_vmem [thread:$0]  %s5, 1024, %s60, [#allocation9], 64, 64, 4
    $region25: #{tpu_custom_call.1} parent=1 // pred_fallthru
      _
    // Predicated region
    $region26: #{tpu_custom_call.1} parent=1 // pred_check
      _
    $region27: #{tpu_custom_call.1} parent=1 // pred_check_branch
      %67 = sbr.rel (0) target = $region29
    $region28: #{tpu_custom_call.1} parent=1 // pred_region
      _
    $region29: #{tpu_custom_call.1} parent=1 // pred_fallthru
      _
    // Predicated region
    $region30: #{tpu_custom_call.1} parent=1 // pred_check
      _
    $region31: #{tpu_custom_call.1} parent=1 // pred_check_branch
      %69 = sbr.rel (0) target = $region33
    $region32: #{tpu_custom_call.1} parent=1 // pred_region
      %70 = dma.done [#allocation3], 3072
    $region33: #{tpu_custom_call.1} parent=1 // pred_fallthru
      _
    // Predicated region
    $region34: #{tpu_custom_call.1} parent=1 // pred_check
      _
    $region35: #{tpu_custom_call.1} parent=1 // pred_check_branch
      %72 = sbr.rel (0) target = $region37
    $region36: #{tpu_custom_call.1} parent=1 // pred_region
      %73 = dma.done [#allocation6], 24576
    $region37: #{tpu_custom_call.1} parent=1 // pred_fallthru
      _
    // Predicated region
    $region38: #{tpu_custom_call.1} parent=1 // pred_check
      _
    $region39: #{tpu_custom_call.1} parent=1 // pred_check_branch
      %75 = sbr.rel (0) target = $region41
    $region40: #{tpu_custom_call.1} parent=1 // pred_region
      %76 = dma.done [#allocation6], 1024
    $region41: #{tpu_custom_call.1} parent=1 // pred_fallthru
      _
    // Predicated region
    $region42: #{tpu_custom_call.1} parent=1 // pred_check
      _
    $region43: #{tpu_custom_call.1} parent=1 // pred_check_branch
      %78 = sbr.rel (0) target = $region45
    $region44: #{tpu_custom_call.1} parent=1 // pred_region
      %79 = dma.done [#allocation9], 1024
    $region45: #{tpu_custom_call.1} parent=1 // pred_fallthru
      _
    %v81 = vld [vmem:[#allocation2] sm:$0xff]
    %v82 = vld [vmem:[#allocation2 + $0x8] sm:$0xff]
    %v83 = vld [vmem:[#allocation2 + $0x10] sm:$0xff]
    %v84 = vld [vmem:[#allocation2 + $0x18] sm:$0xff]
    %v85 = vld [vmem:[#allocation2 + $0x20] sm:$0xff]
    %v86 = vld [vmem:[#allocation2 + $0x28] sm:$0xff]
    %v87 = vld [vmem:[#allocation2 + $0x30] sm:$0xff]
    %v88 = vld [vmem:[#allocation2 + $0x38] sm:$0xff]
    %v89 = vld [vmem:[#allocation2 + $0x40] sm:$0xff]
    %v90 = vld [vmem:[#allocation2 + $0x48] sm:$0xff]
    %v91 = vld [vmem:[#allocation2 + $0x50] sm:$0xff]
    %v92 = vld [vmem:[#allocation2 + $0x58] sm:$0xff]
    %v93 = vld [vmem:[#allocation2 + $0x60] sm:$0xff]
    %v94 = vld [vmem:[#allocation2 + $0x68] sm:$0xff]
    %v95 = vld [vmem:[#allocation2 + $0x70] sm:$0xff]
    %v96 = vld [vmem:[#allocation2 + $0x78] sm:$0xff]
    %v97 = vld [vmem:[#allocation2 + $0x80] sm:$0xff]
    %v98 = vld [vmem:[#allocation2 + $0x88] sm:$0xff]
    %v99 = vld [vmem:[#allocation2 + $0x90] sm:$0xff]
    %v100 = vld [vmem:[#allocation2 + $0x98] sm:$0xff]
    %v101 = vld [vmem:[#allocation2 + $0xa0] sm:$0xff]
    %v102 = vld [vmem:[#allocation2 + $0xa8] sm:$0xff]
    %v103 = vld [vmem:[#allocation2 + $0xb0] sm:$0xff]
    %v104 = vld [vmem:[#allocation2 + $0xb8] sm:$0xff]
    %v105 = vpack.c.bf16 %v81, %v81
    %v106 = vpack.c.bf16 %v82, %v82
    %v107 = vpack.c.bf16 %v83, %v83
    %v108 = vpack.c.bf16 %v84, %v84
    %v109 = vpack.c.bf16 %v85, %v85
    %v110 = vpack.c.bf16 %v86, %v86
    %v111 = vpack.c.bf16 %v87, %v87
    %v112 = vpack.c.bf16 %v88, %v88
    %v113 = vpack.c.bf16 %v89, %v89
    %v114 = vpack.c.bf16 %v90, %v90
    %v115 = vpack.c.bf16 %v91, %v91
    %v116 = vpack.c.bf16 %v92, %v92
    %v117 = vpack.c.bf16 %v93, %v93
    %v118 = vpack.c.bf16 %v94, %v94
    %v119 = vpack.c.bf16 %v95, %v95
    %v120 = vpack.c.bf16 %v96, %v96
    %v121 = vpack.c.bf16 %v97, %v97
    %v122 = vpack.c.bf16 %v98, %v98
    %v123 = vpack.c.bf16 %v99, %v99
    %v124 = vpack.c.bf16 %v100, %v100
    %v125 = vpack.c.bf16 %v101, %v101
    %v126 = vpack.c.bf16 %v102, %v102
    %v127 = vpack.c.bf16 %v103, %v103
    %v128 = vpack.c.bf16 %v104, %v104
    %v129 = vld [vmem:[#allocation5] sm:$0xf]
    %v130 = vld [vmem:[#allocation5 + $0x4] sm:$0xf]
    %v131 = vld [vmem:[#allocation5 + $0x8] sm:$0xf]
    %v132 = vld [vmem:[#allocation5 + $0xc] sm:$0xf]
    %v133 = vld [vmem:[#allocation5 + $0x10] sm:$0xf]
    %v134 = vld [vmem:[#allocation5 + $0x14] sm:$0xf]
    %v135 = vld [vmem:[#allocation5 + $0x18] sm:$0xf]
    %v136 = vld [vmem:[#allocation5 + $0x1c] sm:$0xf]
    %v137 = vld [vmem:[#allocation5 + $0x20] sm:$0xf]
    %v138 = vld [vmem:[#allocation5 + $0x24] sm:$0xf]
    %v139 = vld [vmem:[#allocation5 + $0x28] sm:$0xf]
    %v140 = vld [vmem:[#allocation5 + $0x2c] sm:$0xf]
    %v141 = vld [vmem:[#allocation5 + $0x30] sm:$0xf]
    %v142 = vld [vmem:[#allocation5 + $0x34] sm:$0xf]
    %v143 = vld [vmem:[#allocation5 + $0x38] sm:$0xf]
    %v144 = vld [vmem:[#allocation5 + $0x3c] sm:$0xf]
    %v145 = vld [vmem:[#allocation5 + $0x40] sm:$0xf]
    %v146 = vld [vmem:[#allocation5 + $0x44] sm:$0xf]
    %v147 = vld [vmem:[#allocation5 + $0x48] sm:$0xf]
    %v148 = vld [vmem:[#allocation5 + $0x4c] sm:$0xf]
    %v149 = vld [vmem:[#allocation5 + $0x50] sm:$0xf]
    %v150 = vld [vmem:[#allocation5 + $0x54] sm:$0xf]
    %v151 = vld [vmem:[#allocation5 + $0x58] sm:$0xf]
    %v152 = vld [vmem:[#allocation5 + $0x5c] sm:$0xf]
    %v153 = vld [vmem:[#allocation5 + $0x60] sm:$0xf]
    %v154 = vld [vmem:[#allocation5 + $0x64] sm:$0xf]
    %v155 = vld [vmem:[#allocation5 + $0x68] sm:$0xf]
    %v156 = vld [vmem:[#allocation5 + $0x6c] sm:$0xf]
    %v157 = vld [vmem:[#allocation5 + $0x70] sm:$0xf]
    %v158 = vld [vmem:[#allocation5 + $0x74] sm:$0xf]
    %v159 = vld [vmem:[#allocation5 + $0x78] sm:$0xf]
    %v160 = vld [vmem:[#allocation5 + $0x7c] sm:$0xf]
    %v161 = vld [vmem:[#allocation5 + $0x80] sm:$0xf]
    %v162 = vld [vmem:[#allocation5 + $0x84] sm:$0xf]
    %v163 = vld [vmem:[#allocation5 + $0x88] sm:$0xf]
    %v164 = vld [vmem:[#allocation5 + $0x8c] sm:$0xf]
    %v165 = vld [vmem:[#allocation5 + $0x90] sm:$0xf]
    %v166 = vld [vmem:[#allocation5 + $0x94] sm:$0xf]
    %v167 = vld [vmem:[#allocation5 + $0x98] sm:$0xf]
    %v168 = vld [vmem:[#allocation5 + $0x9c] sm:$0xf]
    %v169 = vld [vmem:[#allocation5 + $0xa0] sm:$0xf]
    %v170 = vld [vmem:[#allocation5 + $0xa4] sm:$0xf]
    %v171 = vld [vmem:[#allocation5 + $0xa8] sm:$0xf]
    %v172 = vld [vmem:[#allocation5 + $0xac] sm:$0xf]
    %v173 = vld [vmem:[#allocation5 + $0xb0] sm:$0xf]
    %v174 = vld [vmem:[#allocation5 + $0xb4] sm:$0xf]
    %v175 = vld [vmem:[#allocation5 + $0xb8] sm:$0xf]
    %v176 = vld [vmem:[#allocation5 + $0xbc] sm:$0xf]
    %v177 = vld [vmem:[#allocation5 + $0xc0] sm:$0xf]
    %v178 = vld [vmem:[#allocation5 + $0xc4] sm:$0xf]
    %v179 = vld [vmem:[#allocation5 + $0xc8] sm:$0xf]
    %v180 = vld [vmem:[#allocation5 + $0xcc] sm:$0xf]
    %v181 = vld [vmem:[#allocation5 + $0xd0] sm:$0xf]
    %v182 = vld [vmem:[#allocation5 + $0xd4] sm:$0xf]
    %v183 = vld [vmem:[#allocation5 + $0xd8] sm:$0xf]
    %v184 = vld [vmem:[#allocation5 + $0xdc] sm:$0xf]
    %v185 = vld [vmem:[#allocation5 + $0xe0] sm:$0xf]
    %v186 = vld [vmem:[#allocation5 + $0xe4] sm:$0xf]
    %v187 = vld [vmem:[#allocation5 + $0xe8] sm:$0xf]
    %v188 = vld [vmem:[#allocation5 + $0xec] sm:$0xf]
    %v189 = vld [vmem:[#allocation5 + $0xf0] sm:$0xf]
    %v190 = vld [vmem:[#allocation5 + $0xf4] sm:$0xf]
    %v191 = vld [vmem:[#allocation5 + $0xf8] sm:$0xf]
    %v192 = vld [vmem:[#allocation5 + $0xfc] sm:$0xf]
    %v193 = vld [vmem:[#allocation5 + $0x100] sm:$0xf]
    %v194 = vld [vmem:[#allocation5 + $0x104] sm:$0xf]
    %v195 = vld [vmem:[#allocation5 + $0x108] sm:$0xf]
    %v196 = vld [vmem:[#allocation5 + $0x10c] sm:$0xf]
    %v197 = vld [vmem:[#allocation5 + $0x110] sm:$0xf]
    %v198 = vld [vmem:[#allocation5 + $0x114] sm:$0xf]
    %v199 = vld [vmem:[#allocation5 + $0x118] sm:$0xf]
    %v200 = vld [vmem:[#allocation5 + $0x11c] sm:$0xf]
    %v201 = vld [vmem:[#allocation5 + $0x120] sm:$0xf]
    %v202 = vld [vmem:[#allocation5 + $0x124] sm:$0xf]
    %v203 = vld [vmem:[#allocation5 + $0x128] sm:$0xf]
    %v204 = vld [vmem:[#allocation5 + $0x12c] sm:$0xf]
    %v205 = vld [vmem:[#allocation5 + $0x130] sm:$0xf]
    %v206 = vld [vmem:[#allocation5 + $0x134] sm:$0xf]
    %v207 = vld [vmem:[#allocation5 + $0x138] sm:$0xf]
    %v208 = vld [vmem:[#allocation5 + $0x13c] sm:$0xf]
    %v209 = vld [vmem:[#allocation5 + $0x140] sm:$0xf]
    %v210 = vld [vmem:[#allocation5 + $0x144] sm:$0xf]
    %v211 = vld [vmem:[#allocation5 + $0x148] sm:$0xf]
    %v212 = vld [vmem:[#allocation5 + $0x14c] sm:$0xf]
    %v213 = vld [vmem:[#allocation5 + $0x150] sm:$0xf]
    %v214 = vld [vmem:[#allocation5 + $0x154] sm:$0xf]
    %v215 = vld [vmem:[#allocation5 + $0x158] sm:$0xf]
    %v216 = vld [vmem:[#allocation5 + $0x15c] sm:$0xf]
    %v217 = vld [vmem:[#allocation5 + $0x160] sm:$0xf]
    %v218 = vld [vmem:[#allocation5 + $0x164] sm:$0xf]
    %v219 = vld [vmem:[#allocation5 + $0x168] sm:$0xf]
    %v220 = vld [vmem:[#allocation5 + $0x16c] sm:$0xf]
    %v221 = vld [vmem:[#allocation5 + $0x170] sm:$0xf]
    %v222 = vld [vmem:[#allocation5 + $0x174] sm:$0xf]
    %v223 = vld [vmem:[#allocation5 + $0x178] sm:$0xf]
    %v224 = vld [vmem:[#allocation5 + $0x17c] sm:$0xf]
    %v225 = vld [vmem:[#allocation5 + $0x180] sm:$0xf]
    %v226 = vld [vmem:[#allocation5 + $0x184] sm:$0xf]
    %v227 = vld [vmem:[#allocation5 + $0x188] sm:$0xf]
    %v228 = vld [vmem:[#allocation5 + $0x18c] sm:$0xf]
    %v229 = vld [vmem:[#allocation5 + $0x190] sm:$0xf]
    %v230 = vld [vmem:[#allocation5 + $0x194] sm:$0xf]
    %v231 = vld [vmem:[#allocation5 + $0x198] sm:$0xf]
    %v232 = vld [vmem:[#allocation5 + $0x19c] sm:$0xf]
    %v233 = vld [vmem:[#allocation5 + $0x1a0] sm:$0xf]
    %v234 = vld [vmem:[#allocation5 + $0x1a4] sm:$0xf]
    %v235 = vld [vmem:[#allocation5 + $0x1a8] sm:$0xf]
    %v236 = vld [vmem:[#allocation5 + $0x1ac] sm:$0xf]
    %v237 = vld [vmem:[#allocation5 + $0x1b0] sm:$0xf]
    %v238 = vld [vmem:[#allocation5 + $0x1b4] sm:$0xf]
    %v239 = vld [vmem:[#allocation5 + $0x1b8] sm:$0xf]
    %v240 = vld [vmem:[#allocation5 + $0x1bc] sm:$0xf]
    %v241 = vld [vmem:[#allocation5 + $0x1c0] sm:$0xf]
    %v242 = vld [vmem:[#allocation5 + $0x1c4] sm:$0xf]
    %v243 = vld [vmem:[#allocation5 + $0x1c8] sm:$0xf]
    %v244 = vld [vmem:[#allocation5 + $0x1cc] sm:$0xf]
    %v245 = vld [vmem:[#allocation5 + $0x1d0] sm:$0xf]
    %v246 = vld [vmem:[#allocation5 + $0x1d4] sm:$0xf]
    %v247 = vld [vmem:[#allocation5 + $0x1d8] sm:$0xf]
    %v248 = vld [vmem:[#allocation5 + $0x1dc] sm:$0xf]
    %v249 = vld [vmem:[#allocation5 + $0x1e0] sm:$0xf]
    %v250 = vld [vmem:[#allocation5 + $0x1e4] sm:$0xf]
    %v251 = vld [vmem:[#allocation5 + $0x1e8] sm:$0xf]
    %v252 = vld [vmem:[#allocation5 + $0x1ec] sm:$0xf]
    %v253 = vld [vmem:[#allocation5 + $0x1f0] sm:$0xf]
    %v254 = vld [vmem:[#allocation5 + $0x1f4] sm:$0xf]
    %v255 = vld [vmem:[#allocation5 + $0x1f8] sm:$0xf]
    %v256 = vld [vmem:[#allocation5 + $0x1fc] sm:$0xf]
    %v257 = vld [vmem:[#allocation5 + $0x200] sm:$0xf]
    %v258 = vld [vmem:[#allocation5 + $0x204] sm:$0xf]
    %v259 = vld [vmem:[#allocation5 + $0x208] sm:$0xf]
    %v260 = vld [vmem:[#allocation5 + $0x20c] sm:$0xf]
    %v261 = vld [vmem:[#allocation5 + $0x210] sm:$0xf]
    %v262 = vld [vmem:[#allocation5 + $0x214] sm:$0xf]
    %v263 = vld [vmem:[#allocation5 + $0x218] sm:$0xf]
    %v264 = vld [vmem:[#allocation5 + $0x21c] sm:$0xf]
    %v265 = vld [vmem:[#allocation5 + $0x220] sm:$0xf]
    %v266 = vld [vmem:[#allocation5 + $0x224] sm:$0xf]
    %v267 = vld [vmem:[#allocation5 + $0x228] sm:$0xf]
    %v268 = vld [vmem:[#allocation5 + $0x22c] sm:$0xf]
    %v269 = vld [vmem:[#allocation5 + $0x230] sm:$0xf]
    %v270 = vld [vmem:[#allocation5 + $0x234] sm:$0xf]
    %v271 = vld [vmem:[#allocation5 + $0x238] sm:$0xf]
    %v272 = vld [vmem:[#allocation5 + $0x23c] sm:$0xf]
    %v273 = vld [vmem:[#allocation5 + $0x240] sm:$0xf]
    %v274 = vld [vmem:[#allocation5 + $0x244] sm:$0xf]
    %v275 = vld [vmem:[#allocation5 + $0x248] sm:$0xf]
    %v276 = vld [vmem:[#allocation5 + $0x24c] sm:$0xf]
    %v277 = vld [vmem:[#allocation5 + $0x250] sm:$0xf]
    %v278 = vld [vmem:[#allocation5 + $0x254] sm:$0xf]
    %v279 = vld [vmem:[#allocation5 + $0x258] sm:$0xf]
    %v280 = vld [vmem:[#allocation5 + $0x25c] sm:$0xf]
    %v281 = vld [vmem:[#allocation5 + $0x260] sm:$0xf]
    %v282 = vld [vmem:[#allocation5 + $0x264] sm:$0xf]
    %v283 = vld [vmem:[#allocation5 + $0x268] sm:$0xf]
    %v284 = vld [vmem:[#allocation5 + $0x26c] sm:$0xf]
    %v285 = vld [vmem:[#allocation5 + $0x270] sm:$0xf]
    %v286 = vld [vmem:[#allocation5 + $0x274] sm:$0xf]
    %v287 = vld [vmem:[#allocation5 + $0x278] sm:$0xf]
    %v288 = vld [vmem:[#allocation5 + $0x27c] sm:$0xf]
    %v289 = vld [vmem:[#allocation5 + $0x280] sm:$0xf]
    %v290 = vld [vmem:[#allocation5 + $0x284] sm:$0xf]
    %v291 = vld [vmem:[#allocation5 + $0x288] sm:$0xf]
    %v292 = vld [vmem:[#allocation5 + $0x28c] sm:$0xf]
    %v293 = vld [vmem:[#allocation5 + $0x290] sm:$0xf]
    %v294 = vld [vmem:[#allocation5 + $0x294] sm:$0xf]
    %v295 = vld [vmem:[#allocation5 + $0x298] sm:$0xf]
    %v296 = vld [vmem:[#allocation5 + $0x29c] sm:$0xf]
    %v297 = vld [vmem:[#allocation5 + $0x2a0] sm:$0xf]
    %v298 = vld [vmem:[#allocation5 + $0x2a4] sm:$0xf]
    %v299 = vld [vmem:[#allocation5 + $0x2a8] sm:$0xf]
    %v300 = vld [vmem:[#allocation5 + $0x2ac] sm:$0xf]
    %v301 = vld [vmem:[#allocation5 + $0x2b0] sm:$0xf]
    %v302 = vld [vmem:[#allocation5 + $0x2b4] sm:$0xf]
    %v303 = vld [vmem:[#allocation5 + $0x2b8] sm:$0xf]
    %v304 = vld [vmem:[#allocation5 + $0x2bc] sm:$0xf]
    %v305 = vld [vmem:[#allocation5 + $0x2c0] sm:$0xf]
    %v306 = vld [vmem:[#allocation5 + $0x2c4] sm:$0xf]
    %v307 = vld [vmem:[#allocation5 + $0x2c8] sm:$0xf]
    %v308 = vld [vmem:[#allocation5 + $0x2cc] sm:$0xf]
    %v309 = vld [vmem:[#allocation5 + $0x2d0] sm:$0xf]
    %v310 = vld [vmem:[#allocation5 + $0x2d4] sm:$0xf]
    %v311 = vld [vmem:[#allocation5 + $0x2d8] sm:$0xf]
    %v312 = vld [vmem:[#allocation5 + $0x2dc] sm:$0xf]
    %v313 = vld [vmem:[#allocation5 + $0x2e0] sm:$0xf]
    %v314 = vld [vmem:[#allocation5 + $0x2e4] sm:$0xf]
    %v315 = vld [vmem:[#allocation5 + $0x2e8] sm:$0xf]
    %v316 = vld [vmem:[#allocation5 + $0x2ec] sm:$0xf]
    %v317 = vld [vmem:[#allocation5 + $0x2f0] sm:$0xf]
    %v318 = vld [vmem:[#allocation5 + $0x2f4] sm:$0xf]
    %v319 = vld [vmem:[#allocation5 + $0x2f8] sm:$0xf]
    %v320 = vld [vmem:[#allocation5 + $0x2fc] sm:$0xf]
    %v321 = vld [vmem:[#allocation5 + $0x300] sm:$0xf]
    %v322 = vld [vmem:[#allocation5 + $0x304] sm:$0xf]
    %v323 = vld [vmem:[#allocation5 + $0x308] sm:$0xf]
    %v324 = vld [vmem:[#allocation5 + $0x30c] sm:$0xf]
    %v325 = vld [vmem:[#allocation5 + $0x310] sm:$0xf]
    %v326 = vld [vmem:[#allocation5 + $0x314] sm:$0xf]
    %v327 = vld [vmem:[#allocation5 + $0x318] sm:$0xf]
    %v328 = vld [vmem:[#allocation5 + $0x31c] sm:$0xf]
    %v329 = vld [vmem:[#allocation5 + $0x320] sm:$0xf]
    %v330 = vld [vmem:[#allocation5 + $0x324] sm:$0xf]
    %v331 = vld [vmem:[#allocation5 + $0x328] sm:$0xf]
    %v332 = vld [vmem:[#allocation5 + $0x32c] sm:$0xf]
    %v333 = vld [vmem:[#allocation5 + $0x330] sm:$0xf]
    %v334 = vld [vmem:[#allocation5 + $0x334] sm:$0xf]
    %v335 = vld [vmem:[#allocation5 + $0x338] sm:$0xf]
    %v336 = vld [vmem:[#allocation5 + $0x33c] sm:$0xf]
    %v337 = vld [vmem:[#allocation5 + $0x340] sm:$0xf]
    %v338 = vld [vmem:[#allocation5 + $0x344] sm:$0xf]
    %v339 = vld [vmem:[#allocation5 + $0x348] sm:$0xf]
    %v340 = vld [vmem:[#allocation5 + $0x34c] sm:$0xf]
    %v341 = vld [vmem:[#allocation5 + $0x350] sm:$0xf]
    %v342 = vld [vmem:[#allocation5 + $0x354] sm:$0xf]
    %v343 = vld [vmem:[#allocation5 + $0x358] sm:$0xf]
    %v344 = vld [vmem:[#allocation5 + $0x35c] sm:$0xf]
    %v345 = vld [vmem:[#allocation5 + $0x360] sm:$0xf]
    %v346 = vld [vmem:[#allocation5 + $0x364] sm:$0xf]
    %v347 = vld [vmem:[#allocation5 + $0x368] sm:$0xf]
    %v348 = vld [vmem:[#allocation5 + $0x36c] sm:$0xf]
    %v349 = vld [vmem:[#allocation5 + $0x370] sm:$0xf]
    %v350 = vld [vmem:[#allocation5 + $0x374] sm:$0xf]
    %v351 = vld [vmem:[#allocation5 + $0x378] sm:$0xf]
    %v352 = vld [vmem:[#allocation5 + $0x37c] sm:$0xf]
    %v353 = vld [vmem:[#allocation5 + $0x380] sm:$0xf]
    %v354 = vld [vmem:[#allocation5 + $0x384] sm:$0xf]
    %v355 = vld [vmem:[#allocation5 + $0x388] sm:$0xf]
    %v356 = vld [vmem:[#allocation5 + $0x38c] sm:$0xf]
    %v357 = vld [vmem:[#allocation5 + $0x390] sm:$0xf]
    %v358 = vld [vmem:[#allocation5 + $0x394] sm:$0xf]
    %v359 = vld [vmem:[#allocation5 + $0x398] sm:$0xf]
    %v360 = vld [vmem:[#allocation5 + $0x39c] sm:$0xf]
    %v361 = vld [vmem:[#allocation5 + $0x3a0] sm:$0xf]
    %v362 = vld [vmem:[#allocation5 + $0x3a4] sm:$0xf]
    %v363 = vld [vmem:[#allocation5 + $0x3a8] sm:$0xf]
    %v364 = vld [vmem:[#allocation5 + $0x3ac] sm:$0xf]
    %v365 = vld [vmem:[#allocation5 + $0x3b0] sm:$0xf]
    %v366 = vld [vmem:[#allocation5 + $0x3b4] sm:$0xf]
    %v367 = vld [vmem:[#allocation5 + $0x3b8] sm:$0xf]
    %v368 = vld [vmem:[#allocation5 + $0x3bc] sm:$0xf]
    %v369 = vld [vmem:[#allocation5 + $0x3c0] sm:$0xf]
    %v370 = vld [vmem:[#allocation5 + $0x3c4] sm:$0xf]
    %v371 = vld [vmem:[#allocation5 + $0x3c8] sm:$0xf]
    %v372 = vld [vmem:[#allocation5 + $0x3cc] sm:$0xf]
    %v373 = vld [vmem:[#allocation5 + $0x3d0] sm:$0xf]
    %v374 = vld [vmem:[#allocation5 + $0x3d4] sm:$0xf]
    %v375 = vld [vmem:[#allocation5 + $0x3d8] sm:$0xf]
    %v376 = vld [vmem:[#allocation5 + $0x3dc] sm:$0xf]
    %v377 = vld [vmem:[#allocation5 + $0x3e0] sm:$0xf]
    %v378 = vld [vmem:[#allocation5 + $0x3e4] sm:$0xf]
    %v379 = vld [vmem:[#allocation5 + $0x3e8] sm:$0xf]
    %v380 = vld [vmem:[#allocation5 + $0x3ec] sm:$0xf]
    %v381 = vld [vmem:[#allocation5 + $0x3f0] sm:$0xf]
    %v382 = vld [vmem:[#allocation5 + $0x3f4] sm:$0xf]
    %v383 = vld [vmem:[#allocation5 + $0x3f8] sm:$0xf]
    %v384 = vld [vmem:[#allocation5 + $0x3fc] sm:$0xf]
    %v385 = vld [vmem:[#allocation5 + $0x400] sm:$0xf]
    %v386 = vld [vmem:[#allocation5 + $0x404] sm:$0xf]
    %v387 = vld [vmem:[#allocation5 + $0x408] sm:$0xf]
    %v388 = vld [vmem:[#allocation5 + $0x40c] sm:$0xf]
    %v389 = vld [vmem:[#allocation5 + $0x410] sm:$0xf]
    %v390 = vld [vmem:[#allocation5 + $0x414] sm:$0xf]
    %v391 = vld [vmem:[#allocation5 + $0x418] sm:$0xf]
    %v392 = vld [vmem:[#allocation5 + $0x41c] sm:$0xf]
    %v393 = vld [vmem:[#allocation5 + $0x420] sm:$0xf]
    %v394 = vld [vmem:[#allocation5 + $0x424] sm:$0xf]
    %v395 = vld [vmem:[#allocation5 + $0x428] sm:$0xf]
    %v396 = vld [vmem:[#allocation5 + $0x42c] sm:$0xf]
    %v397 = vld [vmem:[#allocation5 + $0x430] sm:$0xf]
    %v398 = vld [vmem:[#allocation5 + $0x434] sm:$0xf]
    %v399 = vld [vmem:[#allocation5 + $0x438] sm:$0xf]
    %v400 = vld [vmem:[#allocation5 + $0x43c] sm:$0xf]
    %v401 = vld [vmem:[#allocation5 + $0x440] sm:$0xf]
    %v402 = vld [vmem:[#allocation5 + $0x444] sm:$0xf]
    %v403 = vld [vmem:[#allocation5 + $0x448] sm:$0xf]
    %v404 = vld [vmem:[#allocation5 + $0x44c] sm:$0xf]
    %v405 = vld [vmem:[#allocation5 + $0x450] sm:$0xf]
    %v406 = vld [vmem:[#allocation5 + $0x454] sm:$0xf]
    %v407 = vld [vmem:[#allocation5 + $0x458] sm:$0xf]
    %v408 = vld [vmem:[#allocation5 + $0x45c] sm:$0xf]
    %v409 = vld [vmem:[#allocation5 + $0x460] sm:$0xf]
    %v410 = vld [vmem:[#allocation5 + $0x464] sm:$0xf]
    %v411 = vld [vmem:[#allocation5 + $0x468] sm:$0xf]
    %v412 = vld [vmem:[#allocation5 + $0x46c] sm:$0xf]
    %v413 = vld [vmem:[#allocation5 + $0x470] sm:$0xf]
    %v414 = vld [vmem:[#allocation5 + $0x474] sm:$0xf]
    %v415 = vld [vmem:[#allocation5 + $0x478] sm:$0xf]
    %v416 = vld [vmem:[#allocation5 + $0x47c] sm:$0xf]
    %v417 = vld [vmem:[#allocation5 + $0x480] sm:$0xf]
    %v418 = vld [vmem:[#allocation5 + $0x484] sm:$0xf]
    %v419 = vld [vmem:[#allocation5 + $0x488] sm:$0xf]
    %v420 = vld [vmem:[#allocation5 + $0x48c] sm:$0xf]
    %v421 = vld [vmem:[#allocation5 + $0x490] sm:$0xf]
    %v422 = vld [vmem:[#allocation5 + $0x494] sm:$0xf]
    %v423 = vld [vmem:[#allocation5 + $0x498] sm:$0xf]
    %v424 = vld [vmem:[#allocation5 + $0x49c] sm:$0xf]
    %v425 = vld [vmem:[#allocation5 + $0x4a0] sm:$0xf]
    %v426 = vld [vmem:[#allocation5 + $0x4a4] sm:$0xf]
    %v427 = vld [vmem:[#allocation5 + $0x4a8] sm:$0xf]
    %v428 = vld [vmem:[#allocation5 + $0x4ac] sm:$0xf]
    %v429 = vld [vmem:[#allocation5 + $0x4b0] sm:$0xf]
    %v430 = vld [vmem:[#allocation5 + $0x4b4] sm:$0xf]
    %v431 = vld [vmem:[#allocation5 + $0x4b8] sm:$0xf]
    %v432 = vld [vmem:[#allocation5 + $0x4bc] sm:$0xf]
    %v433 = vld [vmem:[#allocation5 + $0x4c0] sm:$0xf]
    %v434 = vld [vmem:[#allocation5 + $0x4c4] sm:$0xf]
    %v435 = vld [vmem:[#allocation5 + $0x4c8] sm:$0xf]
    %v436 = vld [vmem:[#allocation5 + $0x4cc] sm:$0xf]
    %v437 = vld [vmem:[#allocation5 + $0x4d0] sm:$0xf]
    %v438 = vld [vmem:[#allocation5 + $0x4d4] sm:$0xf]
    %v439 = vld [vmem:[#allocation5 + $0x4d8] sm:$0xf]
    %v440 = vld [vmem:[#allocation5 + $0x4dc] sm:$0xf]
    %v441 = vld [vmem:[#allocation5 + $0x4e0] sm:$0xf]
    %v442 = vld [vmem:[#allocation5 + $0x4e4] sm:$0xf]
    %v443 = vld [vmem:[#allocation5 + $0x4e8] sm:$0xf]
    %v444 = vld [vmem:[#allocation5 + $0x4ec] sm:$0xf]
    %v445 = vld [vmem:[#allocation5 + $0x4f0] sm:$0xf]
    %v446 = vld [vmem:[#allocation5 + $0x4f4] sm:$0xf]
    %v447 = vld [vmem:[#allocation5 + $0x4f8] sm:$0xf]
    %v448 = vld [vmem:[#allocation5 + $0x4fc] sm:$0xf]
    %v449 = vld [vmem:[#allocation5 + $0x500] sm:$0xf]
    %v450 = vld [vmem:[#allocation5 + $0x504] sm:$0xf]
    %v451 = vld [vmem:[#allocation5 + $0x508] sm:$0xf]
    %v452 = vld [vmem:[#allocation5 + $0x50c] sm:$0xf]
    %v453 = vld [vmem:[#allocation5 + $0x510] sm:$0xf]
    %v454 = vld [vmem:[#allocation5 + $0x514] sm:$0xf]
    %v455 = vld [vmem:[#allocation5 + $0x518] sm:$0xf]
    %v456 = vld [vmem:[#allocation5 + $0x51c] sm:$0xf]
    %v457 = vld [vmem:[#allocation5 + $0x520] sm:$0xf]
    %v458 = vld [vmem:[#allocation5 + $0x524] sm:$0xf]
    %v459 = vld [vmem:[#allocation5 + $0x528] sm:$0xf]
    %v460 = vld [vmem:[#allocation5 + $0x52c] sm:$0xf]
    %v461 = vld [vmem:[#allocation5 + $0x530] sm:$0xf]
    %v462 = vld [vmem:[#allocation5 + $0x534] sm:$0xf]
    %v463 = vld [vmem:[#allocation5 + $0x538] sm:$0xf]
    %v464 = vld [vmem:[#allocation5 + $0x53c] sm:$0xf]
    %v465 = vld [vmem:[#allocation5 + $0x540] sm:$0xf]
    %v466 = vld [vmem:[#allocation5 + $0x544] sm:$0xf]
    %v467 = vld [vmem:[#allocation5 + $0x548] sm:$0xf]
    %v468 = vld [vmem:[#allocation5 + $0x54c] sm:$0xf]
    %v469 = vld [vmem:[#allocation5 + $0x550] sm:$0xf]
    %v470 = vld [vmem:[#allocation5 + $0x554] sm:$0xf]
    %v471 = vld [vmem:[#allocation5 + $0x558] sm:$0xf]
    %v472 = vld [vmem:[#allocation5 + $0x55c] sm:$0xf]
    %v473 = vld [vmem:[#allocation5 + $0x560] sm:$0xf]
    %v474 = vld [vmem:[#allocation5 + $0x564] sm:$0xf]
    %v475 = vld [vmem:[#allocation5 + $0x568] sm:$0xf]
    %v476 = vld [vmem:[#allocation5 + $0x56c] sm:$0xf]
    %v477 = vld [vmem:[#allocation5 + $0x570] sm:$0xf]
    %v478 = vld [vmem:[#allocation5 + $0x574] sm:$0xf]
    %v479 = vld [vmem:[#allocation5 + $0x578] sm:$0xf]
    %v480 = vld [vmem:[#allocation5 + $0x57c] sm:$0xf]
    %v481 = vld [vmem:[#allocation5 + $0x580] sm:$0xf]
    %v482 = vld [vmem:[#allocation5 + $0x584] sm:$0xf]
    %v483 = vld [vmem:[#allocation5 + $0x588] sm:$0xf]
    %v484 = vld [vmem:[#allocation5 + $0x58c] sm:$0xf]
    %v485 = vld [vmem:[#allocation5 + $0x590] sm:$0xf]
    %v486 = vld [vmem:[#allocation5 + $0x594] sm:$0xf]
    %v487 = vld [vmem:[#allocation5 + $0x598] sm:$0xf]
    %v488 = vld [vmem:[#allocation5 + $0x59c] sm:$0xf]
    %v489 = vld [vmem:[#allocation5 + $0x5a0] sm:$0xf]
    %v490 = vld [vmem:[#allocation5 + $0x5a4] sm:$0xf]
    %v491 = vld [vmem:[#allocation5 + $0x5a8] sm:$0xf]
    %v492 = vld [vmem:[#allocation5 + $0x5ac] sm:$0xf]
    %v493 = vld [vmem:[#allocation5 + $0x5b0] sm:$0xf]
    %v494 = vld [vmem:[#allocation5 + $0x5b4] sm:$0xf]
    %v495 = vld [vmem:[#allocation5 + $0x5b8] sm:$0xf]
    %v496 = vld [vmem:[#allocation5 + $0x5bc] sm:$0xf]
    %v497 = vld [vmem:[#allocation5 + $0x5c0] sm:$0xf]
    %v498 = vld [vmem:[#allocation5 + $0x5c4] sm:$0xf]
    %v499 = vld [vmem:[#allocation5 + $0x5c8] sm:$0xf]
    %v500 = vld [vmem:[#allocation5 + $0x5cc] sm:$0xf]
    %v501 = vld [vmem:[#allocation5 + $0x5d0] sm:$0xf]
    %v502 = vld [vmem:[#allocation5 + $0x5d4] sm:$0xf]
    %v503 = vld [vmem:[#allocation5 + $0x5d8] sm:$0xf]
    %v504 = vld [vmem:[#allocation5 + $0x5dc] sm:$0xf]
    %v505 = vld [vmem:[#allocation5 + $0x5e0] sm:$0xf]
    %v506 = vld [vmem:[#allocation5 + $0x5e4] sm:$0xf]
    %v507 = vld [vmem:[#allocation5 + $0x5e8] sm:$0xf]
    %v508 = vld [vmem:[#allocation5 + $0x5ec] sm:$0xf]
    %v509 = vld [vmem:[#allocation5 + $0x5f0] sm:$0xf]
    %v510 = vld [vmem:[#allocation5 + $0x5f4] sm:$0xf]
    %v511 = vld [vmem:[#allocation5 + $0x5f8] sm:$0xf]
    %v512 = vld [vmem:[#allocation5 + $0x5fc] sm:$0xf]
    %v513 = vld [vmem:[%s2] sm:$0x1]
    %v515 = vlaneseq
    %v516 = vshrl.u32 %v515, 7
    %v517 = vsub.s32 0, %v516
    %v518 = vrot.slane %v513, %v517
    %v904 = vunpack.c.l.b16 %v129
    %v905 = vunpack.c.l.b16 %v130
    %v906 = vunpack.c.l.b16 %v131
    %v907 = vunpack.c.l.b16 %v132
    %v908 = vunpack.c.l.b16 %v133
    %v909 = vunpack.c.l.b16 %v134
    %v910 = vunpack.c.l.b16 %v135
    %v911 = vunpack.c.l.b16 %v136
    %v912 = vunpack.c.l.b16 %v137
    %v913 = vunpack.c.l.b16 %v138
    %v914 = vunpack.c.l.b16 %v139
    %v915 = vunpack.c.l.b16 %v140
    %v916 = vunpack.c.l.b16 %v141
    %v917 = vunpack.c.l.b16 %v142
    %v918 = vunpack.c.l.b16 %v143
    %v919 = vunpack.c.l.b16 %v144
    %v920 = vunpack.c.l.b16 %v145
    %v921 = vunpack.c.l.b16 %v146
    %v922 = vunpack.c.l.b16 %v147
    %v923 = vunpack.c.l.b16 %v148
    %v924 = vunpack.c.l.b16 %v149
    %v925 = vunpack.c.l.b16 %v150
    %v926 = vunpack.c.l.b16 %v151
    %v927 = vunpack.c.l.b16 %v152
    %v928 = vunpack.c.l.b16 %v153
    %v929 = vunpack.c.l.b16 %v154
    %v930 = vunpack.c.l.b16 %v155
    %v931 = vunpack.c.l.b16 %v156
    %v932 = vunpack.c.l.b16 %v157
    %v933 = vunpack.c.l.b16 %v158
    %v934 = vunpack.c.l.b16 %v159
    %v935 = vunpack.c.l.b16 %v160
    %v936 = vunpack.c.l.b16 %v161
    %v937 = vunpack.c.l.b16 %v162
    %v938 = vunpack.c.l.b16 %v163
    %v939 = vunpack.c.l.b16 %v164
    %v940 = vunpack.c.l.b16 %v165
    %v941 = vunpack.c.l.b16 %v166
    %v942 = vunpack.c.l.b16 %v167
    %v943 = vunpack.c.l.b16 %v168
    %v944 = vunpack.c.l.b16 %v169
    %v945 = vunpack.c.l.b16 %v170
    %v946 = vunpack.c.l.b16 %v171
    %v947 = vunpack.c.l.b16 %v172
    %v948 = vunpack.c.l.b16 %v173
    %v949 = vunpack.c.l.b16 %v174
    %v950 = vunpack.c.l.b16 %v175
    %v951 = vunpack.c.l.b16 %v176
    %v952 = vunpack.c.l.b16 %v177
    %v953 = vunpack.c.l.b16 %v178
    %v954 = vunpack.c.l.b16 %v179
    %v955 = vunpack.c.l.b16 %v180
    %v956 = vunpack.c.l.b16 %v181
    %v957 = vunpack.c.l.b16 %v182
    %v958 = vunpack.c.l.b16 %v183
    %v959 = vunpack.c.l.b16 %v184
    %v960 = vunpack.c.l.b16 %v185
    %v961 = vunpack.c.l.b16 %v186
    %v962 = vunpack.c.l.b16 %v187
    %v963 = vunpack.c.l.b16 %v188
    %v964 = vunpack.c.l.b16 %v189
    %v965 = vunpack.c.l.b16 %v190
    %v966 = vunpack.c.l.b16 %v191
    %v967 = vunpack.c.l.b16 %v192
    %v968 = vunpack.c.l.b16 %v193
    %v969 = vunpack.c.l.b16 %v194
    %v970 = vunpack.c.l.b16 %v195
    %v971 = vunpack.c.l.b16 %v196
    %v972 = vunpack.c.l.b16 %v197
    %v973 = vunpack.c.l.b16 %v198
    %v974 = vunpack.c.l.b16 %v199
    %v975 = vunpack.c.l.b16 %v200
    %v976 = vunpack.c.l.b16 %v201
    %v977 = vunpack.c.l.b16 %v202
    %v978 = vunpack.c.l.b16 %v203
    %v979 = vunpack.c.l.b16 %v204
    %v980 = vunpack.c.l.b16 %v205
    %v981 = vunpack.c.l.b16 %v206
    %v982 = vunpack.c.l.b16 %v207
    %v983 = vunpack.c.l.b16 %v208
    %v984 = vunpack.c.l.b16 %v209
    %v985 = vunpack.c.l.b16 %v210
    %v986 = vunpack.c.l.b16 %v211
    %v987 = vunpack.c.l.b16 %v212
    %v988 = vunpack.c.l.b16 %v213
    %v989 = vunpack.c.l.b16 %v214
    %v990 = vunpack.c.l.b16 %v215
    %v991 = vunpack.c.l.b16 %v216
    %v992 = vunpack.c.l.b16 %v217
    %v993 = vunpack.c.l.b16 %v218
    %v994 = vunpack.c.l.b16 %v219
    %v995 = vunpack.c.l.b16 %v220
    %v996 = vunpack.c.l.b16 %v221
    %v997 = vunpack.c.l.b16 %v222
    %v998 = vunpack.c.l.b16 %v223
    %v999 = vunpack.c.l.b16 %v224
    %v1000 = vunpack.c.l.b16 %v225
    %v1001 = vunpack.c.l.b16 %v226
    %v1002 = vunpack.c.l.b16 %v227
    %v1003 = vunpack.c.l.b16 %v228
    %v1004 = vunpack.c.l.b16 %v229
    %v1005 = vunpack.c.l.b16 %v230
    %v1006 = vunpack.c.l.b16 %v231
    %v1007 = vunpack.c.l.b16 %v232
    %v1008 = vunpack.c.l.b16 %v233
    %v1009 = vunpack.c.l.b16 %v234
    %v1010 = vunpack.c.l.b16 %v235
    %v1011 = vunpack.c.l.b16 %v236
    %v1012 = vunpack.c.l.b16 %v237
    %v1013 = vunpack.c.l.b16 %v238
    %v1014 = vunpack.c.l.b16 %v239
    %v1015 = vunpack.c.l.b16 %v240
    %v1016 = vunpack.c.l.b16 %v241
    %v1017 = vunpack.c.l.b16 %v242
    %v1018 = vunpack.c.l.b16 %v243
    %v1019 = vunpack.c.l.b16 %v244
    %v1020 = vunpack.c.l.b16 %v245
    %v1021 = vunpack.c.l.b16 %v246
    %v1022 = vunpack.c.l.b16 %v247
    %v1023 = vunpack.c.l.b16 %v248
    %v1024 = vunpack.c.l.b16 %v249
    %v1025 = vunpack.c.l.b16 %v250
    %v1026 = vunpack.c.l.b16 %v251
    %v1027 = vunpack.c.l.b16 %v252
    %v1028 = vunpack.c.l.b16 %v253
    %v1029 = vunpack.c.l.b16 %v254
    %v1030 = vunpack.c.l.b16 %v255
    %v1031 = vunpack.c.l.b16 %v256
    %v1032 = vunpack.c.l.b16 %v257
    %v1033 = vunpack.c.l.b16 %v258
    %v1034 = vunpack.c.l.b16 %v259
    %v1035 = vunpack.c.l.b16 %v260
    %v1036 = vunpack.c.l.b16 %v261
    %v1037 = vunpack.c.l.b16 %v262
    %v1038 = vunpack.c.l.b16 %v263
    %v1039 = vunpack.c.l.b16 %v264
    %v1040 = vunpack.c.l.b16 %v265
    %v1041 = vunpack.c.l.b16 %v266
    %v1042 = vunpack.c.l.b16 %v267
    %v1043 = vunpack.c.l.b16 %v268
    %v1044 = vunpack.c.l.b16 %v269
    %v1045 = vunpack.c.l.b16 %v270
    %v1046 = vunpack.c.l.b16 %v271
    %v1047 = vunpack.c.l.b16 %v272
    %v1048 = vunpack.c.l.b16 %v273
    %v1049 = vunpack.c.l.b16 %v274
    %v1050 = vunpack.c.l.b16 %v275
    %v1051 = vunpack.c.l.b16 %v276
    %v1052 = vunpack.c.l.b16 %v277
    %v1053 = vunpack.c.l.b16 %v278
    %v1054 = vunpack.c.l.b16 %v279
    %v1055 = vunpack.c.l.b16 %v280
    %v1056 = vunpack.c.l.b16 %v281
    %v1057 = vunpack.c.l.b16 %v282
    %v1058 = vunpack.c.l.b16 %v283
    %v1059 = vunpack.c.l.b16 %v284
    %v1060 = vunpack.c.l.b16 %v285
    %v1061 = vunpack.c.l.b16 %v286
    %v1062 = vunpack.c.l.b16 %v287
    %v1063 = vunpack.c.l.b16 %v288
    %v1064 = vunpack.c.l.b16 %v289
    %v1065 = vunpack.c.l.b16 %v290
    %v1066 = vunpack.c.l.b16 %v291
    %v1067 = vunpack.c.l.b16 %v292
    %v1068 = vunpack.c.l.b16 %v293
    %v1069 = vunpack.c.l.b16 %v294
    %v1070 = vunpack.c.l.b16 %v295
    %v1071 = vunpack.c.l.b16 %v296
    %v1072 = vunpack.c.l.b16 %v297
    %v1073 = vunpack.c.l.b16 %v298
    %v1074 = vunpack.c.l.b16 %v299
    %v1075 = vunpack.c.l.b16 %v300
    %v1076 = vunpack.c.l.b16 %v301
    %v1077 = vunpack.c.l.b16 %v302
    %v1078 = vunpack.c.l.b16 %v303
    %v1079 = vunpack.c.l.b16 %v304
    %v1080 = vunpack.c.l.b16 %v305
    %v1081 = vunpack.c.l.b16 %v306
    %v1082 = vunpack.c.l.b16 %v307
    %v1083 = vunpack.c.l.b16 %v308
    %v1084 = vunpack.c.l.b16 %v309
    %v1085 = vunpack.c.l.b16 %v310
    %v1086 = vunpack.c.l.b16 %v311
    %v1087 = vunpack.c.l.b16 %v312
    %v1088 = vunpack.c.l.b16 %v313
    %v1089 = vunpack.c.l.b16 %v314
    %v1090 = vunpack.c.l.b16 %v315
    %v1091 = vunpack.c.l.b16 %v316
    %v1092 = vunpack.c.l.b16 %v317
    %v1093 = vunpack.c.l.b16 %v318
    %v1094 = vunpack.c.l.b16 %v319
    %v1095 = vunpack.c.l.b16 %v320
    %v1096 = vunpack.c.l.b16 %v321
    %v1097 = vunpack.c.l.b16 %v322
    %v1098 = vunpack.c.l.b16 %v323
    %v1099 = vunpack.c.l.b16 %v324
    %v1100 = vunpack.c.l.b16 %v325
    %v1101 = vunpack.c.l.b16 %v326
    %v1102 = vunpack.c.l.b16 %v327
    %v1103 = vunpack.c.l.b16 %v328
    %v1104 = vunpack.c.l.b16 %v329
    %v1105 = vunpack.c.l.b16 %v330
    %v1106 = vunpack.c.l.b16 %v331
    %v1107 = vunpack.c.l.b16 %v332
    %v1108 = vunpack.c.l.b16 %v333
    %v1109 = vunpack.c.l.b16 %v334
    %v1110 = vunpack.c.l.b16 %v335
    %v1111 = vunpack.c.l.b16 %v336
    %v1112 = vunpack.c.l.b16 %v337
    %v1113 = vunpack.c.l.b16 %v338
    %v1114 = vunpack.c.l.b16 %v339
    %v1115 = vunpack.c.l.b16 %v340
    %v1116 = vunpack.c.l.b16 %v341
    %v1117 = vunpack.c.l.b16 %v342
    %v1118 = vunpack.c.l.b16 %v343
    %v1119 = vunpack.c.l.b16 %v344
    %v1120 = vunpack.c.l.b16 %v345
    %v1121 = vunpack.c.l.b16 %v346
    %v1122 = vunpack.c.l.b16 %v347
    %v1123 = vunpack.c.l.b16 %v348
    %v1124 = vunpack.c.l.b16 %v349
    %v1125 = vunpack.c.l.b16 %v350
    %v1126 = vunpack.c.l.b16 %v351
    %v1127 = vunpack.c.l.b16 %v352
    %v1128 = vunpack.c.l.b16 %v353
    %v1129 = vunpack.c.l.b16 %v354
    %v1130 = vunpack.c.l.b16 %v355
    %v1131 = vunpack.c.l.b16 %v356
    %v1132 = vunpack.c.l.b16 %v357
    %v1133 = vunpack.c.l.b16 %v358
    %v1134 = vunpack.c.l.b16 %v359
    %v1135 = vunpack.c.l.b16 %v360
    %v1136 = vunpack.c.l.b16 %v361
    %v1137 = vunpack.c.l.b16 %v362
    %v1138 = vunpack.c.l.b16 %v363
    %v1139 = vunpack.c.l.b16 %v364
    %v1140 = vunpack.c.l.b16 %v365
    %v1141 = vunpack.c.l.b16 %v366
    %v1142 = vunpack.c.l.b16 %v367
    %v1143 = vunpack.c.l.b16 %v368
    %v1144 = vunpack.c.l.b16 %v369
    %v1145 = vunpack.c.l.b16 %v370
    %v1146 = vunpack.c.l.b16 %v371
    %v1147 = vunpack.c.l.b16 %v372
    %v1148 = vunpack.c.l.b16 %v373
    %v1149 = vunpack.c.l.b16 %v374
    %v1150 = vunpack.c.l.b16 %v375
    %v1151 = vunpack.c.l.b16 %v376
    %v1152 = vunpack.c.l.b16 %v377
    %v1153 = vunpack.c.l.b16 %v378
    %v1154 = vunpack.c.l.b16 %v379
    %v1155 = vunpack.c.l.b16 %v380
    %v1156 = vunpack.c.l.b16 %v381
    %v1157 = vunpack.c.l.b16 %v382
    %v1158 = vunpack.c.l.b16 %v383
    %v1159 = vunpack.c.l.b16 %v384
    %v1160 = vunpack.c.l.b16 %v385
    %v1161 = vunpack.c.l.b16 %v386
    %v1162 = vunpack.c.l.b16 %v387
    %v1163 = vunpack.c.l.b16 %v388
    %v1164 = vunpack.c.l.b16 %v389
    %v1165 = vunpack.c.l.b16 %v390
    %v1166 = vunpack.c.l.b16 %v391
    %v1167 = vunpack.c.l.b16 %v392
    %v1168 = vunpack.c.l.b16 %v393
    %v1169 = vunpack.c.l.b16 %v394
    %v1170 = vunpack.c.l.b16 %v395
    %v1171 = vunpack.c.l.b16 %v396
    %v1172 = vunpack.c.l.b16 %v397
    %v1173 = vunpack.c.l.b16 %v398
    %v1174 = vunpack.c.l.b16 %v399
    %v1175 = vunpack.c.l.b16 %v400
    %v1176 = vunpack.c.l.b16 %v401
    %v1177 = vunpack.c.l.b16 %v402
    %v1178 = vunpack.c.l.b16 %v403
    %v1179 = vunpack.c.l.b16 %v404
    %v1180 = vunpack.c.l.b16 %v405
    %v1181 = vunpack.c.l.b16 %v406
    %v1182 = vunpack.c.l.b16 %v407
    %v1183 = vunpack.c.l.b16 %v408
    %v1184 = vunpack.c.l.b16 %v409
    %v1185 = vunpack.c.l.b16 %v410
    %v1186 = vunpack.c.l.b16 %v411
    %v1187 = vunpack.c.l.b16 %v412
    %v1188 = vunpack.c.l.b16 %v413
    %v1189 = vunpack.c.l.b16 %v414
    %v1190 = vunpack.c.l.b16 %v415
    %v1191 = vunpack.c.l.b16 %v416
    %v1192 = vunpack.c.l.b16 %v417
    %v1193 = vunpack.c.l.b16 %v418
    %v1194 = vunpack.c.l.b16 %v419
    %v1195 = vunpack.c.l.b16 %v420
    %v1196 = vunpack.c.l.b16 %v421
    %v1197 = vunpack.c.l.b16 %v422
    %v1198 = vunpack.c.l.b16 %v423
    %v1199 = vunpack.c.l.b16 %v424
    %v1200 = vunpack.c.l.b16 %v425
    %v1201 = vunpack.c.l.b16 %v426
    %v1202 = vunpack.c.l.b16 %v427
    %v1203 = vunpack.c.l.b16 %v428
    %v1204 = vunpack.c.l.b16 %v429
    %v1205 = vunpack.c.l.b16 %v430
    %v1206 = vunpack.c.l.b16 %v431
    %v1207 = vunpack.c.l.b16 %v432
    %v1208 = vunpack.c.l.b16 %v433
    %v1209 = vunpack.c.l.b16 %v434
    %v1210 = vunpack.c.l.b16 %v435
    %v1211 = vunpack.c.l.b16 %v436
    %v1212 = vunpack.c.l.b16 %v437
    %v1213 = vunpack.c.l.b16 %v438
    %v1214 = vunpack.c.l.b16 %v439
    %v1215 = vunpack.c.l.b16 %v440
    %v1216 = vunpack.c.l.b16 %v441
    %v1217 = vunpack.c.l.b16 %v442
    %v1218 = vunpack.c.l.b16 %v443
    %v1219 = vunpack.c.l.b16 %v444
    %v1220 = vunpack.c.l.b16 %v445
    %v1221 = vunpack.c.l.b16 %v446
    %v1222 = vunpack.c.l.b16 %v447
    %v1223 = vunpack.c.l.b16 %v448
    %v1224 = vunpack.c.l.b16 %v449
    %v1225 = vunpack.c.l.b16 %v450
    %v1226 = vunpack.c.l.b16 %v451
    %v1227 = vunpack.c.l.b16 %v452
    %v1228 = vunpack.c.l.b16 %v453
    %v1229 = vunpack.c.l.b16 %v454
    %v1230 = vunpack.c.l.b16 %v455
    %v1231 = vunpack.c.l.b16 %v456
    %v1232 = vunpack.c.l.b16 %v457
    %v1233 = vunpack.c.l.b16 %v458
    %v1234 = vunpack.c.l.b16 %v459
    %v1235 = vunpack.c.l.b16 %v460
    %v1236 = vunpack.c.l.b16 %v461
    %v1237 = vunpack.c.l.b16 %v462
    %v1238 = vunpack.c.l.b16 %v463
    %v1239 = vunpack.c.l.b16 %v464
    %v1240 = vunpack.c.l.b16 %v465
    %v1241 = vunpack.c.l.b16 %v466
    %v1242 = vunpack.c.l.b16 %v467
    %v1243 = vunpack.c.l.b16 %v468
    %v1244 = vunpack.c.l.b16 %v469
    %v1245 = vunpack.c.l.b16 %v470
    %v1246 = vunpack.c.l.b16 %v471
    %v1247 = vunpack.c.l.b16 %v472
    %v1248 = vunpack.c.l.b16 %v473
    %v1249 = vunpack.c.l.b16 %v474
    %v1250 = vunpack.c.l.b16 %v475
    %v1251 = vunpack.c.l.b16 %v476
    %v1252 = vunpack.c.l.b16 %v477
    %v1253 = vunpack.c.l.b16 %v478
    %v1254 = vunpack.c.l.b16 %v479
    %v1255 = vunpack.c.l.b16 %v480
    %v1256 = vunpack.c.l.b16 %v481
    %v1257 = vunpack.c.l.b16 %v482
    %v1258 = vunpack.c.l.b16 %v483
    %v1259 = vunpack.c.l.b16 %v484
    %v1260 = vunpack.c.l.b16 %v485
    %v1261 = vunpack.c.l.b16 %v486
    %v1262 = vunpack.c.l.b16 %v487
    %v1263 = vunpack.c.l.b16 %v488
    %v1264 = vunpack.c.l.b16 %v489
    %v1265 = vunpack.c.l.b16 %v490
    %v1266 = vunpack.c.l.b16 %v491
    %v1267 = vunpack.c.l.b16 %v492
    %v1268 = vunpack.c.l.b16 %v493
    %v1269 = vunpack.c.l.b16 %v494
    %v1270 = vunpack.c.l.b16 %v495
    %v1271 = vunpack.c.l.b16 %v496
    %v1272 = vunpack.c.l.b16 %v497
    %v1273 = vunpack.c.l.b16 %v498
    %v1274 = vunpack.c.l.b16 %v499
    %v1275 = vunpack.c.l.b16 %v500
    %v1276 = vunpack.c.l.b16 %v501
    %v1277 = vunpack.c.l.b16 %v502
    %v1278 = vunpack.c.l.b16 %v503
    %v1279 = vunpack.c.l.b16 %v504
    %v1280 = vunpack.c.l.b16 %v505
    %v1281 = vunpack.c.l.b16 %v506
    %v1282 = vunpack.c.l.b16 %v507
    %v1283 = vunpack.c.l.b16 %v508
    %v1284 = vunpack.c.l.b16 %v509
    %v1285 = vunpack.c.l.b16 %v510
    %v1286 = vunpack.c.l.b16 %v511
    %v1287 = vunpack.c.l.b16 %v512
    %v1288 = vpack.c.b16 %v905, %v904
    %v1289 = vpack.c.b16 %v907, %v906
    %v1290 = vpack.c.b16 %v909, %v908
    %v1291 = vpack.c.b16 %v911, %v910
    %v1292 = vpack.c.b16 %v913, %v912
    %v1293 = vpack.c.b16 %v915, %v914
    %v1294 = vpack.c.b16 %v917, %v916
    %v1295 = vpack.c.b16 %v919, %v918
    %v1296 = vpack.c.b16 %v921, %v920
    %v1297 = vpack.c.b16 %v923, %v922
    %v1298 = vpack.c.b16 %v925, %v924
    %v1299 = vpack.c.b16 %v927, %v926
    %v1300 = vpack.c.b16 %v929, %v928
    %v1301 = vpack.c.b16 %v931, %v930
    %v1302 = vpack.c.b16 %v933, %v932
    %v1303 = vpack.c.b16 %v935, %v934
    %v1304 = vpack.c.b16 %v937, %v936
    %v1305 = vpack.c.b16 %v939, %v938
    %v1306 = vpack.c.b16 %v941, %v940
    %v1307 = vpack.c.b16 %v943, %v942
    %v1308 = vpack.c.b16 %v945, %v944
    %v1309 = vpack.c.b16 %v947, %v946
    %v1310 = vpack.c.b16 %v949, %v948
    %v1311 = vpack.c.b16 %v951, %v950
    %v1312 = vpack.c.b16 %v953, %v952
    %v1313 = vpack.c.b16 %v955, %v954
    %v1314 = vpack.c.b16 %v957, %v956
    %v1315 = vpack.c.b16 %v959, %v958
    %v1316 = vpack.c.b16 %v961, %v960
    %v1317 = vpack.c.b16 %v963, %v962
    %v1318 = vpack.c.b16 %v965, %v964
    %v1319 = vpack.c.b16 %v967, %v966
    %v1320 = vpack.c.b16 %v969, %v968
    %v1321 = vpack.c.b16 %v971, %v970
    %v1322 = vpack.c.b16 %v973, %v972
    %v1323 = vpack.c.b16 %v975, %v974
    %v1324 = vpack.c.b16 %v977, %v976
    %v1325 = vpack.c.b16 %v979, %v978
    %v1326 = vpack.c.b16 %v981, %v980
    %v1327 = vpack.c.b16 %v983, %v982
    %v1328 = vpack.c.b16 %v985, %v984
    %v1329 = vpack.c.b16 %v987, %v986
    %v1330 = vpack.c.b16 %v989, %v988
    %v1331 = vpack.c.b16 %v991, %v990
    %v1332 = vpack.c.b16 %v993, %v992
    %v1333 = vpack.c.b16 %v995, %v994
    %v1334 = vpack.c.b16 %v997, %v996
    %v1335 = vpack.c.b16 %v999, %v998
    %v1336 = vpack.c.b16 %v1001, %v1000
    %v1337 = vpack.c.b16 %v1003, %v1002
    %v1338 = vpack.c.b16 %v1005, %v1004
    %v1339 = vpack.c.b16 %v1007, %v1006
    %v1340 = vpack.c.b16 %v1009, %v1008
    %v1341 = vpack.c.b16 %v1011, %v1010
    %v1342 = vpack.c.b16 %v1013, %v1012
    %v1343 = vpack.c.b16 %v1015, %v1014
    %v1344 = vpack.c.b16 %v1017, %v1016
    %v1345 = vpack.c.b16 %v1019, %v1018
    %v1346 = vpack.c.b16 %v1021, %v1020
    %v1347 = vpack.c.b16 %v1023, %v1022
    %v1348 = vpack.c.b16 %v1025, %v1024
    %v1349 = vpack.c.b16 %v1027, %v1026
    %v1350 = vpack.c.b16 %v1029, %v1028
    %v1351 = vpack.c.b16 %v1031, %v1030
    %v1352 = vpack.c.b16 %v1033, %v1032
    %v1353 = vpack.c.b16 %v1035, %v1034
    %v1354 = vpack.c.b16 %v1037, %v1036
    %v1355 = vpack.c.b16 %v1039, %v1038
    %v1356 = vpack.c.b16 %v1041, %v1040
    %v1357 = vpack.c.b16 %v1043, %v1042
    %v1358 = vpack.c.b16 %v1045, %v1044
    %v1359 = vpack.c.b16 %v1047, %v1046
    %v1360 = vpack.c.b16 %v1049, %v1048
    %v1361 = vpack.c.b16 %v1051, %v1050
    %v1362 = vpack.c.b16 %v1053, %v1052
    %v1363 = vpack.c.b16 %v1055, %v1054
    %v1364 = vpack.c.b16 %v1057, %v1056
    %v1365 = vpack.c.b16 %v1059, %v1058
    %v1366 = vpack.c.b16 %v1061, %v1060
    %v1367 = vpack.c.b16 %v1063, %v1062
    %v1368 = vpack.c.b16 %v1065, %v1064
    %v1369 = vpack.c.b16 %v1067, %v1066
    %v1370 = vpack.c.b16 %v1069, %v1068
    %v1371 = vpack.c.b16 %v1071, %v1070
    %v1372 = vpack.c.b16 %v1073, %v1072
    %v1373 = vpack.c.b16 %v1075, %v1074
    %v1374 = vpack.c.b16 %v1077, %v1076
    %v1375 = vpack.c.b16 %v1079, %v1078
    %v1376 = vpack.c.b16 %v1081, %v1080
    %v1377 = vpack.c.b16 %v1083, %v1082
    %v1378 = vpack.c.b16 %v1085, %v1084
    %v1379 = vpack.c.b16 %v1087, %v1086
    %v1380 = vpack.c.b16 %v1089, %v1088
    %v1381 = vpack.c.b16 %v1091, %v1090
    %v1382 = vpack.c.b16 %v1093, %v1092
    %v1383 = vpack.c.b16 %v1095, %v1094
    %v1384 = vpack.c.b16 %v1097, %v1096
    %v1385 = vpack.c.b16 %v1099, %v1098
    %v1386 = vpack.c.b16 %v1101, %v1100
    %v1387 = vpack.c.b16 %v1103, %v1102
    %v1388 = vpack.c.b16 %v1105, %v1104
    %v1389 = vpack.c.b16 %v1107, %v1106
    %v1390 = vpack.c.b16 %v1109, %v1108
    %v1391 = vpack.c.b16 %v1111, %v1110
    %v1392 = vpack.c.b16 %v1113, %v1112
    %v1393 = vpack.c.b16 %v1115, %v1114
    %v1394 = vpack.c.b16 %v1117, %v1116
    %v1395 = vpack.c.b16 %v1119, %v1118
    %v1396 = vpack.c.b16 %v1121, %v1120
    %v1397 = vpack.c.b16 %v1123, %v1122
    %v1398 = vpack.c.b16 %v1125, %v1124
    %v1399 = vpack.c.b16 %v1127, %v1126
    %v1400 = vpack.c.b16 %v1129, %v1128
    %v1401 = vpack.c.b16 %v1131, %v1130
    %v1402 = vpack.c.b16 %v1133, %v1132
    %v1403 = vpack.c.b16 %v1135, %v1134
    %v1404 = vpack.c.b16 %v1137, %v1136
    %v1405 = vpack.c.b16 %v1139, %v1138
    %v1406 = vpack.c.b16 %v1141, %v1140
    %v1407 = vpack.c.b16 %v1143, %v1142
    %v1408 = vpack.c.b16 %v1145, %v1144
    %v1409 = vpack.c.b16 %v1147, %v1146
    %v1410 = vpack.c.b16 %v1149, %v1148
    %v1411 = vpack.c.b16 %v1151, %v1150
    %v1412 = vpack.c.b16 %v1153, %v1152
    %v1413 = vpack.c.b16 %v1155, %v1154
    %v1414 = vpack.c.b16 %v1157, %v1156
    %v1415 = vpack.c.b16 %v1159, %v1158
    %v1416 = vpack.c.b16 %v1161, %v1160
    %v1417 = vpack.c.b16 %v1163, %v1162
    %v1418 = vpack.c.b16 %v1165, %v1164
    %v1419 = vpack.c.b16 %v1167, %v1166
    %v1420 = vpack.c.b16 %v1169, %v1168
    %v1421 = vpack.c.b16 %v1171, %v1170
    %v1422 = vpack.c.b16 %v1173, %v1172
    %v1423 = vpack.c.b16 %v1175, %v1174
    %v1424 = vpack.c.b16 %v1177, %v1176
    %v1425 = vpack.c.b16 %v1179, %v1178
    %v1426 = vpack.c.b16 %v1181, %v1180
    %v1427 = vpack.c.b16 %v1183, %v1182
    %v1428 = vpack.c.b16 %v1185, %v1184
    %v1429 = vpack.c.b16 %v1187, %v1186
    %v1430 = vpack.c.b16 %v1189, %v1188
    %v1431 = vpack.c.b16 %v1191, %v1190
    %v1432 = vpack.c.b16 %v1193, %v1192
    %v1433 = vpack.c.b16 %v1195, %v1194
    %v1434 = vpack.c.b16 %v1197, %v1196
    %v1435 = vpack.c.b16 %v1199, %v1198
    %v1436 = vpack.c.b16 %v1201, %v1200
    %v1437 = vpack.c.b16 %v1203, %v1202
    %v1438 = vpack.c.b16 %v1205, %v1204
    %v1439 = vpack.c.b16 %v1207, %v1206
    %v1440 = vpack.c.b16 %v1209, %v1208
    %v1441 = vpack.c.b16 %v1211, %v1210
    %v1442 = vpack.c.b16 %v1213, %v1212
    %v1443 = vpack.c.b16 %v1215, %v1214
    %v1444 = vpack.c.b16 %v1217, %v1216
    %v1445 = vpack.c.b16 %v1219, %v1218
    %v1446 = vpack.c.b16 %v1221, %v1220
    %v1447 = vpack.c.b16 %v1223, %v1222
    %v1448 = vpack.c.b16 %v1225, %v1224
    %v1449 = vpack.c.b16 %v1227, %v1226
    %v1450 = vpack.c.b16 %v1229, %v1228
    %v1451 = vpack.c.b16 %v1231, %v1230
    %v1452 = vpack.c.b16 %v1233, %v1232
    %v1453 = vpack.c.b16 %v1235, %v1234
    %v1454 = vpack.c.b16 %v1237, %v1236
    %v1455 = vpack.c.b16 %v1239, %v1238
    %v1456 = vpack.c.b16 %v1241, %v1240
    %v1457 = vpack.c.b16 %v1243, %v1242
    %v1458 = vpack.c.b16 %v1245, %v1244
    %v1459 = vpack.c.b16 %v1247, %v1246
    %v1460 = vpack.c.b16 %v1249, %v1248
    %v1461 = vpack.c.b16 %v1251, %v1250
    %v1462 = vpack.c.b16 %v1253, %v1252
    %v1463 = vpack.c.b16 %v1255, %v1254
    %v1464 = vpack.c.b16 %v1257, %v1256
    %v1465 = vpack.c.b16 %v1259, %v1258
    %v1466 = vpack.c.b16 %v1261, %v1260
    %v1467 = vpack.c.b16 %v1263, %v1262
    %v1468 = vpack.c.b16 %v1265, %v1264
    %v1469 = vpack.c.b16 %v1267, %v1266
    %v1470 = vpack.c.b16 %v1269, %v1268
    %v1471 = vpack.c.b16 %v1271, %v1270
    %v1472 = vpack.c.b16 %v1273, %v1272
    %v1473 = vpack.c.b16 %v1275, %v1274
    %v1474 = vpack.c.b16 %v1277, %v1276
    %v1475 = vpack.c.b16 %v1279, %v1278
    %v1476 = vpack.c.b16 %v1281, %v1280
    %v1477 = vpack.c.b16 %v1283, %v1282
    %v1478 = vpack.c.b16 %v1285, %v1284
    %v1479 = vpack.c.b16 %v1287, %v1286
    %1672 = vmatprep.subr.bf16.mxu0 0
    %1673 = vmatpush1.bf16.msra.mxu0 %v1288
    %1674 = vmatprep.subr.bf16.mxu0 0
    %1675 = vmatpush1.bf16.msra.mxu0 %v1289
    %1676 = vmatprep.subr.bf16.mxu0 0
    %1677 = vmatpush1.bf16.msra.mxu0 %v1290
    %1678 = vmatprep.subr.bf16.mxu0 0
    %1679 = vmatpush1.bf16.msra.mxu0 %v1291
    %1680 = vmatprep.subr.bf16.mxu0 0
    %1681 = vmatpush1.bf16.msra.mxu0 %v1292
    %1682 = vmatprep.subr.bf16.mxu0 0
    %1683 = vmatpush1.bf16.msra.mxu0 %v1293
    %1684 = vmatprep.subr.bf16.mxu0 0
    %1685 = vmatpush1.bf16.msra.mxu0 %v1294
    %1686 = vmatprep.subr.bf16.mxu0 0
    %1687 = vmatpush1.bf16.msra.mxu0 %v1295
    %1688 = vmatprep.subr.bf16.mxu0 0
    %1689 = vmatpush1.bf16.msra.mxu0 %v1296
    %1690 = vmatprep.subr.bf16.mxu0 0
    %1691 = vmatpush1.bf16.msra.mxu0 %v1297
    %1692 = vmatprep.subr.bf16.mxu0 0
    %1693 = vmatpush1.bf16.msra.mxu0 %v1298
    %1694 = vmatprep.subr.bf16.mxu0 0
    %1695 = vmatpush1.bf16.msra.mxu0 %v1299
    %1696 = vmatprep.subr.bf16.mxu0 0
    %1697 = vmatpush1.bf16.msra.mxu0 %v1300
    %1698 = vmatprep.subr.bf16.mxu0 0
    %1699 = vmatpush1.bf16.msra.mxu0 %v1301
    %1700 = vmatprep.subr.bf16.mxu0 0
    %1701 = vmatpush1.bf16.msra.mxu0 %v1302
    %1702 = vmatprep.subr.bf16.mxu0 0
    %1703 = vmatpush1.bf16.msra.mxu0 %v1303
    %1704 = vmatprep.mubr.bf16.mxu0 %v106
    %1705 = vmatmul.mubr.bf16.gmra.mrb[0].mxu0 %v105
    %v1706 = vpop.f32.mrb[0].mxu0
    %v1707 = vadd.f32 %v518, %v1706
    %v1708 = vpop.f32.mrb[0].mxu0
    %v1709 = vpop.f32.mrb[0].mxu0
    %v1710 = vpop.f32.mrb[0].mxu0
    %1711 = vdwg.mxu0
    %1712 = vmatprep.subr.bf16.mxu0 0
    %1713 = vmatpush1.bf16.msra.mxu0 %v1304
    %1714 = vmatprep.subr.bf16.mxu0 0
    %1715 = vmatpush1.bf16.msra.mxu0 %v1305
    %1716 = vmatprep.subr.bf16.mxu0 0
    %1717 = vmatpush1.bf16.msra.mxu0 %v1306
    %1718 = vmatprep.subr.bf16.mxu0 0
    %1719 = vmatpush1.bf16.msra.mxu0 %v1307
    %1720 = vmatprep.subr.bf16.mxu0 0
    %1721 = vmatpush1.bf16.msra.mxu0 %v1308
    %1722 = vmatprep.subr.bf16.mxu0 0
    %1723 = vmatpush1.bf16.msra.mxu0 %v1309
    %1724 = vmatprep.subr.bf16.mxu0 0
    %1725 = vmatpush1.bf16.msra.mxu0 %v1310
    %1726 = vmatprep.subr.bf16.mxu0 0
    %1727 = vmatpush1.bf16.msra.mxu0 %v1311
    %1728 = vmatprep.subr.bf16.mxu0 0
    %1729 = vmatpush1.bf16.msra.mxu0 %v1312
    %1730 = vmatprep.subr.bf16.mxu0 0
    %1731 = vmatpush1.bf16.msra.mxu0 %v1313
    %1732 = vmatprep.subr.bf16.mxu0 0
    %1733 = vmatpush1.bf16.msra.mxu0 %v1314
    %1734 = vmatprep.subr.bf16.mxu0 0
    %1735 = vmatpush1.bf16.msra.mxu0 %v1315
    %1736 = vmatprep.subr.bf16.mxu0 0
    %1737 = vmatpush1.bf16.msra.mxu0 %v1316
    %1738 = vmatprep.subr.bf16.mxu0 0
    %1739 = vmatpush1.bf16.msra.mxu0 %v1317
    %1740 = vmatprep.subr.bf16.mxu0 0
    %1741 = vmatpush1.bf16.msra.mxu0 %v1318
    %1742 = vmatprep.subr.bf16.mxu0 0
    %1743 = vmatpush1.bf16.msra.mxu0 %v1319
    %1744 = vmatprep.mubr.bf16.mxu0 %v108
    %1745 = vmatmul.mubr.bf16.gmra.mrb[0].mxu0 %v107
    %v1746 = vpop.f32.mrb[0].mxu0
    %v1747 = vadd.f32 %v1707, %v1746
    %v1748 = vpop.f32.mrb[0].mxu0
    %v1749 = vpop.f32.mrb[0].mxu0
    %v1750 = vpop.f32.mrb[0].mxu0
    %1751 = vdwg.mxu0
    %1752 = vmatprep.subr.bf16.mxu0 0
    %1753 = vmatpush1.bf16.msra.mxu0 %v1320
    %1754 = vmatprep.subr.bf16.mxu0 0
    %1755 = vmatpush1.bf16.msra.mxu0 %v1321
    %1756 = vmatprep.subr.bf16.mxu0 0
    %1757 = vmatpush1.bf16.msra.mxu0 %v1322
    %1758 = vmatprep.subr.bf16.mxu0 0
    %1759 = vmatpush1.bf16.msra.mxu0 %v1323
    %1760 = vmatprep.subr.bf16.mxu0 0
    %1761 = vmatpush1.bf16.msra.mxu0 %v1324
    %1762 = vmatprep.subr.bf16.mxu0 0
    %1763 = vmatpush1.bf16.msra.mxu0 %v1325
    %1764 = vmatprep.subr.bf16.mxu0 0
    %1765 = vmatpush1.bf16.msra.mxu0 %v1326
    %1766 = vmatprep.subr.bf16.mxu0 0
    %1767 = vmatpush1.bf16.msra.mxu0 %v1327
    %1768 = vmatprep.subr.bf16.mxu0 0
    %1769 = vmatpush1.bf16.msra.mxu0 %v1328
    %1770 = vmatprep.subr.bf16.mxu0 0
    %1771 = vmatpush1.bf16.msra.mxu0 %v1329
    %1772 = vmatprep.subr.bf16.mxu0 0
    %1773 = vmatpush1.bf16.msra.mxu0 %v1330
    %1774 = vmatprep.subr.bf16.mxu0 0
    %1775 = vmatpush1.bf16.msra.mxu0 %v1331
    %1776 = vmatprep.subr.bf16.mxu0 0
    %1777 = vmatpush1.bf16.msra.mxu0 %v1332
    %1778 = vmatprep.subr.bf16.mxu0 0
    %1779 = vmatpush1.bf16.msra.mxu0 %v1333
    %1780 = vmatprep.subr.bf16.mxu0 0
    %1781 = vmatpush1.bf16.msra.mxu0 %v1334
    %1782 = vmatprep.subr.bf16.mxu0 0
    %1783 = vmatpush1.bf16.msra.mxu0 %v1335
    %1784 = vmatprep.mubr.bf16.mxu0 %v110
    %1785 = vmatmul.mubr.bf16.gmra.mrb[0].mxu0 %v109
    %v1786 = vpop.f32.mrb[0].mxu0
    %v1787 = vadd.f32 %v1747, %v1786
    %v1788 = vpop.f32.mrb[0].mxu0
    %v1789 = vpop.f32.mrb[0].mxu0
    %v1790 = vpop.f32.mrb[0].mxu0
    %1791 = vdwg.mxu0
    %1792 = vmatprep.subr.bf16.mxu0 0
    %1793 = vmatpush1.bf16.msra.mxu0 %v1336
    %1794 = vmatprep.subr.bf16.mxu0 0
    %1795 = vmatpush1.bf16.msra.mxu0 %v1337
    %1796 = vmatprep.subr.bf16.mxu0 0
    %1797 = vmatpush1.bf16.msra.mxu0 %v1338
    %1798 = vmatprep.subr.bf16.mxu0 0
    %1799 = vmatpush1.bf16.msra.mxu0 %v1339
    %1800 = vmatprep.subr.bf16.mxu0 0
    %1801 = vmatpush1.bf16.msra.mxu0 %v1340
    %1802 = vmatprep.subr.bf16.mxu0 0
    %1803 = vmatpush1.bf16.msra.mxu0 %v1341
    %1804 = vmatprep.subr.bf16.mxu0 0
    %1805 = vmatpush1.bf16.msra.mxu0 %v1342
    %1806 = vmatprep.subr.bf16.mxu0 0
    %1807 = vmatpush1.bf16.msra.mxu0 %v1343
    %1808 = vmatprep.subr.bf16.mxu0 0
    %1809 = vmatpush1.bf16.msra.mxu0 %v1344
    %1810 = vmatprep.subr.bf16.mxu0 0
    %1811 = vmatpush1.bf16.msra.mxu0 %v1345
    %1812 = vmatprep.subr.bf16.mxu0 0
    %1813 = vmatpush1.bf16.msra.mxu0 %v1346
    %1814 = vmatprep.subr.bf16.mxu0 0
    %1815 = vmatpush1.bf16.msra.mxu0 %v1347
    %1816 = vmatprep.subr.bf16.mxu0 0
    %1817 = vmatpush1.bf16.msra.mxu0 %v1348
    %1818 = vmatprep.subr.bf16.mxu0 0
    %1819 = vmatpush1.bf16.msra.mxu0 %v1349
    %1820 = vmatprep.subr.bf16.mxu0 0
    %1821 = vmatpush1.bf16.msra.mxu0 %v1350
    %1822 = vmatprep.subr.bf16.mxu0 0
    %1823 = vmatpush1.bf16.msra.mxu0 %v1351
    %1824 = vmatprep.mubr.bf16.mxu0 %v112
    %1825 = vmatmul.mubr.bf16.gmra.mrb[0].mxu0 %v111
    %v1826 = vpop.f32.mrb[0].mxu0
    %v1827 = vadd.f32 %v1787, %v1826
    %v1828 = vpop.f32.mrb[0].mxu0
    %v1829 = vpop.f32.mrb[0].mxu0
    %v1830 = vpop.f32.mrb[0].mxu0
    %1831 = vdwg.mxu0
    %1832 = vmatprep.subr.bf16.mxu0 0
    %1833 = vmatpush1.bf16.msra.mxu0 %v1352
    %1834 = vmatprep.subr.bf16.mxu0 0
    %1835 = vmatpush1.bf16.msra.mxu0 %v1353
    %1836 = vmatprep.subr.bf16.mxu0 0
    %1837 = vmatpush1.bf16.msra.mxu0 %v1354
    %1838 = vmatprep.subr.bf16.mxu0 0
    %1839 = vmatpush1.bf16.msra.mxu0 %v1355
    %1840 = vmatprep.subr.bf16.mxu0 0
    %1841 = vmatpush1.bf16.msra.mxu0 %v1356
    %1842 = vmatprep.subr.bf16.mxu0 0
    %1843 = vmatpush1.bf16.msra.mxu0 %v1357
    %1844 = vmatprep.subr.bf16.mxu0 0
    %1845 = vmatpush1.bf16.msra.mxu0 %v1358
    %1846 = vmatprep.subr.bf16.mxu0 0
    %1847 = vmatpush1.bf16.msra.mxu0 %v1359
    %1848 = vmatprep.subr.bf16.mxu0 0
    %1849 = vmatpush1.bf16.msra.mxu0 %v1360
    %1850 = vmatprep.subr.bf16.mxu0 0
    %1851 = vmatpush1.bf16.msra.mxu0 %v1361
    %1852 = vmatprep.subr.bf16.mxu0 0
    %1853 = vmatpush1.bf16.msra.mxu0 %v1362
    %1854 = vmatprep.subr.bf16.mxu0 0
    %1855 = vmatpush1.bf16.msra.mxu0 %v1363
    %1856 = vmatprep.subr.bf16.mxu0 0
    %1857 = vmatpush1.bf16.msra.mxu0 %v1364
    %1858 = vmatprep.subr.bf16.mxu0 0
    %1859 = vmatpush1.bf16.msra.mxu0 %v1365
    %1860 = vmatprep.subr.bf16.mxu0 0
    %1861 = vmatpush1.bf16.msra.mxu0 %v1366
    %1862 = vmatprep.subr.bf16.mxu0 0
    %1863 = vmatpush1.bf16.msra.mxu0 %v1367
    %1864 = vmatprep.mubr.bf16.mxu0 %v114
    %1865 = vmatmul.mubr.bf16.gmra.mrb[0].mxu0 %v113
    %v1866 = vpop.f32.mrb[0].mxu0
    %v1867 = vadd.f32 %v1827, %v1866
    %v1868 = vpop.f32.mrb[0].mxu0
    %v1869 = vpop.f32.mrb[0].mxu0
    %v1870 = vpop.f32.mrb[0].mxu0
    %1871 = vdwg.mxu0
    %1872 = vmatprep.subr.bf16.mxu0 0
    %1873 = vmatpush1.bf16.msra.mxu0 %v1368
    %1874 = vmatprep.subr.bf16.mxu0 0
    %1875 = vmatpush1.bf16.msra.mxu0 %v1369
    %1876 = vmatprep.subr.bf16.mxu0 0
    %1877 = vmatpush1.bf16.msra.mxu0 %v1370
    %1878 = vmatprep.subr.bf16.mxu0 0
    %1879 = vmatpush1.bf16.msra.mxu0 %v1371
    %1880 = vmatprep.subr.bf16.mxu0 0
    %1881 = vmatpush1.bf16.msra.mxu0 %v1372
    %1882 = vmatprep.subr.bf16.mxu0 0
    %1883 = vmatpush1.bf16.msra.mxu0 %v1373
    %1884 = vmatprep.subr.bf16.mxu0 0
    %1885 = vmatpush1.bf16.msra.mxu0 %v1374
    %1886 = vmatprep.subr.bf16.mxu0 0
    %1887 = vmatpush1.bf16.msra.mxu0 %v1375
    %1888 = vmatprep.subr.bf16.mxu0 0
    %1889 = vmatpush1.bf16.msra.mxu0 %v1376
    %1890 = vmatprep.subr.bf16.mxu0 0
    %1891 = vmatpush1.bf16.msra.mxu0 %v1377
    %1892 = vmatprep.subr.bf16.mxu0 0
    %1893 = vmatpush1.bf16.msra.mxu0 %v1378
    %1894 = vmatprep.subr.bf16.mxu0 0
    %1895 = vmatpush1.bf16.msra.mxu0 %v1379
    %1896 = vmatprep.subr.bf16.mxu0 0
    %1897 = vmatpush1.bf16.msra.mxu0 %v1380
    %1898 = vmatprep.subr.bf16.mxu0 0
    %1899 = vmatpush1.bf16.msra.mxu0 %v1381
    %1900 = vmatprep.subr.bf16.mxu0 0
    %1901 = vmatpush1.bf16.msra.mxu0 %v1382
    %1902 = vmatprep.subr.bf16.mxu0 0
    %1903 = vmatpush1.bf16.msra.mxu0 %v1383
    %1904 = vmatprep.mubr.bf16.mxu0 %v116
    %1905 = vmatmul.mubr.bf16.gmra.mrb[0].mxu0 %v115
    %v1906 = vpop.f32.mrb[0].mxu0
    %v1907 = vadd.f32 %v1867, %v1906
    %v1908 = vpop.f32.mrb[0].mxu0
    %v1909 = vpop.f32.mrb[0].mxu0
    %v1910 = vpop.f32.mrb[0].mxu0
    %1911 = vdwg.mxu0
    %1912 = vmatprep.subr.bf16.mxu0 0
    %1913 = vmatpush1.bf16.msra.mxu0 %v1384
    %1914 = vmatprep.subr.bf16.mxu0 0
    %1915 = vmatpush1.bf16.msra.mxu0 %v1385
    %1916 = vmatprep.subr.bf16.mxu0 0
    %1917 = vmatpush1.bf16.msra.mxu0 %v1386
    %1918 = vmatprep.subr.bf16.mxu0 0
    %1919 = vmatpush1.bf16.msra.mxu0 %v1387
    %1920 = vmatprep.subr.bf16.mxu0 0
    %1921 = vmatpush1.bf16.msra.mxu0 %v1388
    %1922 = vmatprep.subr.bf16.mxu0 0
    %1923 = vmatpush1.bf16.msra.mxu0 %v1389
    %1924 = vmatprep.subr.bf16.mxu0 0
    %1925 = vmatpush1.bf16.msra.mxu0 %v1390
    %1926 = vmatprep.subr.bf16.mxu0 0
    %1927 = vmatpush1.bf16.msra.mxu0 %v1391
    %1928 = vmatprep.subr.bf16.mxu0 0
    %1929 = vmatpush1.bf16.msra.mxu0 %v1392
    %1930 = vmatprep.subr.bf16.mxu0 0
    %1931 = vmatpush1.bf16.msra.mxu0 %v1393
    %1932 = vmatprep.subr.bf16.mxu0 0
    %1933 = vmatpush1.bf16.msra.mxu0 %v1394
    %1934 = vmatprep.subr.bf16.mxu0 0
    %1935 = vmatpush1.bf16.msra.mxu0 %v1395
    %1936 = vmatprep.subr.bf16.mxu0 0
    %1937 = vmatpush1.bf16.msra.mxu0 %v1396
    %1938 = vmatprep.subr.bf16.mxu0 0
    %1939 = vmatpush1.bf16.msra.mxu0 %v1397
    %1940 = vmatprep.subr.bf16.mxu0 0
    %1941 = vmatpush1.bf16.msra.mxu0 %v1398
    %1942 = vmatprep.subr.bf16.mxu0 0
    %1943 = vmatpush1.bf16.msra.mxu0 %v1399
    %1944 = vmatprep.mubr.bf16.mxu0 %v118
    %1945 = vmatmul.mubr.bf16.gmra.mrb[0].mxu0 %v117
    %v1946 = vpop.f32.mrb[0].mxu0
    %v1947 = vadd.f32 %v1907, %v1946
    %v1948 = vpop.f32.mrb[0].mxu0
    %v1949 = vpop.f32.mrb[0].mxu0
    %v1950 = vpop.f32.mrb[0].mxu0
    %1951 = vdwg.mxu0
    %1952 = vmatprep.subr.bf16.mxu0 0
    %1953 = vmatpush1.bf16.msra.mxu0 %v1400
    %1954 = vmatprep.subr.bf16.mxu0 0
    %1955 = vmatpush1.bf16.msra.mxu0 %v1401
    %1956 = vmatprep.subr.bf16.mxu0 0
    %1957 = vmatpush1.bf16.msra.mxu0 %v1402
    %1958 = vmatprep.subr.bf16.mxu0 0
    %1959 = vmatpush1.bf16.msra.mxu0 %v1403
    %1960 = vmatprep.subr.bf16.mxu0 0
    %1961 = vmatpush1.bf16.msra.mxu0 %v1404
    %1962 = vmatprep.subr.bf16.mxu0 0
    %1963 = vmatpush1.bf16.msra.mxu0 %v1405
    %1964 = vmatprep.subr.bf16.mxu0 0
    %1965 = vmatpush1.bf16.msra.mxu0 %v1406
    %1966 = vmatprep.subr.bf16.mxu0 0
    %1967 = vmatpush1.bf16.msra.mxu0 %v1407
    %1968 = vmatprep.subr.bf16.mxu0 0
    %1969 = vmatpush1.bf16.msra.mxu0 %v1408
    %1970 = vmatprep.subr.bf16.mxu0 0
    %1971 = vmatpush1.bf16.msra.mxu0 %v1409
    %1972 = vmatprep.subr.bf16.mxu0 0
    %1973 = vmatpush1.bf16.msra.mxu0 %v1410
    %1974 = vmatprep.subr.bf16.mxu0 0
    %1975 = vmatpush1.bf16.msra.mxu0 %v1411
    %1976 = vmatprep.subr.bf16.mxu0 0
    %1977 = vmatpush1.bf16.msra.mxu0 %v1412
    %1978 = vmatprep.subr.bf16.mxu0 0
    %1979 = vmatpush1.bf16.msra.mxu0 %v1413
    %1980 = vmatprep.subr.bf16.mxu0 0
    %1981 = vmatpush1.bf16.msra.mxu0 %v1414
    %1982 = vmatprep.subr.bf16.mxu0 0
    %1983 = vmatpush1.bf16.msra.mxu0 %v1415
    %1984 = vmatprep.mubr.bf16.mxu0 %v120
    %1985 = vmatmul.mubr.bf16.gmra.mrb[0].mxu0 %v119
    %v1986 = vpop.f32.mrb[0].mxu0
    %v1987 = vadd.f32 %v1947, %v1986
    %v1988 = vpop.f32.mrb[0].mxu0
    %v1989 = vpop.f32.mrb[0].mxu0
    %v1990 = vpop.f32.mrb[0].mxu0
    %1991 = vdwg.mxu0
    %1992 = vmatprep.subr.bf16.mxu0 0
    %1993 = vmatpush1.bf16.msra.mxu0 %v1416
    %1994 = vmatprep.subr.bf16.mxu0 0
    %1995 = vmatpush1.bf16.msra.mxu0 %v1417
    %1996 = vmatprep.subr.bf16.mxu0 0
    %1997 = vmatpush1.bf16.msra.mxu0 %v1418
    %1998 = vmatprep.subr.bf16.mxu0 0
    %1999 = vmatpush1.bf16.msra.mxu0 %v1419
    %2000 = vmatprep.subr.bf16.mxu0 0
    %2001 = vmatpush1.bf16.msra.mxu0 %v1420
    %2002 = vmatprep.subr.bf16.mxu0 0
    %2003 = vmatpush1.bf16.msra.mxu0 %v1421
    %2004 = vmatprep.subr.bf16.mxu0 0
    %2005 = vmatpush1.bf16.msra.mxu0 %v1422
    %2006 = vmatprep.subr.bf16.mxu0 0
    %2007 = vmatpush1.bf16.msra.mxu0 %v1423
    %2008 = vmatprep.subr.bf16.mxu0 0
    %2009 = vmatpush1.bf16.msra.mxu0 %v1424
    %2010 = vmatprep.subr.bf16.mxu0 0
    %2011 = vmatpush1.bf16.msra.mxu0 %v1425
    %2012 = vmatprep.subr.bf16.mxu0 0
    %2013 = vmatpush1.bf16.msra.mxu0 %v1426
    %2014 = vmatprep.subr.bf16.mxu0 0
    %2015 = vmatpush1.bf16.msra.mxu0 %v1427
    %2016 = vmatprep.subr.bf16.mxu0 0
    %2017 = vmatpush1.bf16.msra.mxu0 %v1428
    %2018 = vmatprep.subr.bf16.mxu0 0
    %2019 = vmatpush1.bf16.msra.mxu0 %v1429
    %2020 = vmatprep.subr.bf16.mxu0 0
    %2021 = vmatpush1.bf16.msra.mxu0 %v1430
    %2022 = vmatprep.subr.bf16.mxu0 0
    %2023 = vmatpush1.bf16.msra.mxu0 %v1431
    %2024 = vmatprep.mubr.bf16.mxu0 %v122
    %2025 = vmatmul.mubr.bf16.gmra.mrb[0].mxu0 %v121
    %v2026 = vpop.f32.mrb[0].mxu0
    %v2027 = vadd.f32 %v1987, %v2026
    %v2028 = vpop.f32.mrb[0].mxu0
    %v2029 = vpop.f32.mrb[0].mxu0
    %v2030 = vpop.f32.mrb[0].mxu0
    %2031 = vdwg.mxu0
    %2032 = vmatprep.subr.bf16.mxu0 0
    %2033 = vmatpush1.bf16.msra.mxu0 %v1432
    %2034 = vmatprep.subr.bf16.mxu0 0
    %2035 = vmatpush1.bf16.msra.mxu0 %v1433
    %2036 = vmatprep.subr.bf16.mxu0 0
    %2037 = vmatpush1.bf16.msra.mxu0 %v1434
    %2038 = vmatprep.subr.bf16.mxu0 0
    %2039 = vmatpush1.bf16.msra.mxu0 %v1435
    %2040 = vmatprep.subr.bf16.mxu0 0
    %2041 = vmatpush1.bf16.msra.mxu0 %v1436
    %2042 = vmatprep.subr.bf16.mxu0 0
    %2043 = vmatpush1.bf16.msra.mxu0 %v1437
    %2044 = vmatprep.subr.bf16.mxu0 0
    %2045 = vmatpush1.bf16.msra.mxu0 %v1438
    %2046 = vmatprep.subr.bf16.mxu0 0
    %2047 = vmatpush1.bf16.msra.mxu0 %v1439
    %2048 = vmatprep.subr.bf16.mxu0 0
    %2049 = vmatpush1.bf16.msra.mxu0 %v1440
    %2050 = vmatprep.subr.bf16.mxu0 0
    %2051 = vmatpush1.bf16.msra.mxu0 %v1441
    %2052 = vmatprep.subr.bf16.mxu0 0
    %2053 = vmatpush1.bf16.msra.mxu0 %v1442
    %2054 = vmatprep.subr.bf16.mxu0 0
    %2055 = vmatpush1.bf16.msra.mxu0 %v1443
    %2056 = vmatprep.subr.bf16.mxu0 0
    %2057 = vmatpush1.bf16.msra.mxu0 %v1444
    %2058 = vmatprep.subr.bf16.mxu0 0
    %2059 = vmatpush1.bf16.msra.mxu0 %v1445
    %2060 = vmatprep.subr.bf16.mxu0 0
    %2061 = vmatpush1.bf16.msra.mxu0 %v1446
    %2062 = vmatprep.subr.bf16.mxu0 0
    %2063 = vmatpush1.bf16.msra.mxu0 %v1447
    %2064 = vmatprep.mubr.bf16.mxu0 %v124
    %2065 = vmatmul.mubr.bf16.gmra.mrb[0].mxu0 %v123
    %v2066 = vpop.f32.mrb[0].mxu0
    %v2067 = vadd.f32 %v2027, %v2066
    %v2068 = vpop.f32.mrb[0].mxu0
    %v2069 = vpop.f32.mrb[0].mxu0
    %v2070 = vpop.f32.mrb[0].mxu0
    %2071 = vdwg.mxu0
    %2072 = vmatprep.subr.bf16.mxu0 0
    %2073 = vmatpush1.bf16.msra.mxu0 %v1448
    %2074 = vmatprep.subr.bf16.mxu0 0
    %2075 = vmatpush1.bf16.msra.mxu0 %v1449
    %2076 = vmatprep.subr.bf16.mxu0 0
    %2077 = vmatpush1.bf16.msra.mxu0 %v1450
    %2078 = vmatprep.subr.bf16.mxu0 0
    %2079 = vmatpush1.bf16.msra.mxu0 %v1451
    %2080 = vmatprep.subr.bf16.mxu0 0
    %2081 = vmatpush1.bf16.msra.mxu0 %v1452
    %2082 = vmatprep.subr.bf16.mxu0 0
    %2083 = vmatpush1.bf16.msra.mxu0 %v1453
    %2084 = vmatprep.subr.bf16.mxu0 0
    %2085 = vmatpush1.bf16.msra.mxu0 %v1454
    %2086 = vmatprep.subr.bf16.mxu0 0
    %2087 = vmatpush1.bf16.msra.mxu0 %v1455
    %2088 = vmatprep.subr.bf16.mxu0 0
    %2089 = vmatpush1.bf16.msra.mxu0 %v1456
    %2090 = vmatprep.subr.bf16.mxu0 0
    %2091 = vmatpush1.bf16.msra.mxu0 %v1457
    %2092 = vmatprep.subr.bf16.mxu0 0
    %2093 = vmatpush1.bf16.msra.mxu0 %v1458
    %2094 = vmatprep.subr.bf16.mxu0 0
    %2095 = vmatpush1.bf16.msra.mxu0 %v1459
    %2096 = vmatprep.subr.bf16.mxu0 0
    %2097 = vmatpush1.bf16.msra.mxu0 %v1460
    %2098 = vmatprep.subr.bf16.mxu0 0
    %2099 = vmatpush1.bf16.msra.mxu0 %v1461
    %2100 = vmatprep.subr.bf16.mxu0 0
    %2101 = vmatpush1.bf16.msra.mxu0 %v1462
    %2102 = vmatprep.subr.bf16.mxu0 0
    %2103 = vmatpush1.bf16.msra.mxu0 %v1463
    %2104 = vmatprep.mubr.bf16.mxu0 %v126
    %2105 = vmatmul.mubr.bf16.gmra.mrb[0].mxu0 %v125
    %v2106 = vpop.f32.mrb[0].mxu0
    %v2107 = vadd.f32 %v2067, %v2106
    %v2108 = vpop.f32.mrb[0].mxu0
    %v2109 = vpop.f32.mrb[0].mxu0
    %v2110 = vpop.f32.mrb[0].mxu0
    %2111 = vdwg.mxu0
    %2112 = vmatprep.subr.bf16.mxu0 0
    %2113 = vmatpush1.bf16.msra.mxu0 %v1464
    %2114 = vmatprep.subr.bf16.mxu0 0
    %2115 = vmatpush1.bf16.msra.mxu0 %v1465
    %2116 = vmatprep.subr.bf16.mxu0 0
    %2117 = vmatpush1.bf16.msra.mxu0 %v1466
    %2118 = vmatprep.subr.bf16.mxu0 0
    %2119 = vmatpush1.bf16.msra.mxu0 %v1467
    %2120 = vmatprep.subr.bf16.mxu0 0
    %2121 = vmatpush1.bf16.msra.mxu0 %v1468
    %2122 = vmatprep.subr.bf16.mxu0 0
    %2123 = vmatpush1.bf16.msra.mxu0 %v1469
    %2124 = vmatprep.subr.bf16.mxu0 0
    %2125 = vmatpush1.bf16.msra.mxu0 %v1470
    %2126 = vmatprep.subr.bf16.mxu0 0
    %2127 = vmatpush1.bf16.msra.mxu0 %v1471
    %2128 = vmatprep.subr.bf16.mxu0 0
    %2129 = vmatpush1.bf16.msra.mxu0 %v1472
    %2130 = vmatprep.subr.bf16.mxu0 0
    %2131 = vmatpush1.bf16.msra.mxu0 %v1473
    %2132 = vmatprep.subr.bf16.mxu0 0
    %2133 = vmatpush1.bf16.msra.mxu0 %v1474
    %2134 = vmatprep.subr.bf16.mxu0 0
    %2135 = vmatpush1.bf16.msra.mxu0 %v1475
    %2136 = vmatprep.subr.bf16.mxu0 0
    %2137 = vmatpush1.bf16.msra.mxu0 %v1476
    %2138 = vmatprep.subr.bf16.mxu0 0
    %2139 = vmatpush1.bf16.msra.mxu0 %v1477
    %2140 = vmatprep.subr.bf16.mxu0 0
    %2141 = vmatpush1.bf16.msra.mxu0 %v1478
    %2142 = vmatprep.subr.bf16.mxu0 0
    %2143 = vmatpush1.bf16.msra.mxu0 %v1479
    %2144 = vmatprep.mubr.bf16.mxu0 %v128
    %2145 = vmatmul.mubr.bf16.gmra.mrb[0].mxu0 %v127
    %v2146 = vpop.f32.mrb[0].mxu0
    %v2147 = vadd.f32 %v2107, %v2146
    %v2148 = vpop.f32.mrb[0].mxu0
    %v2149 = vpop.f32.mrb[0].mxu0
    %v2150 = vpop.f32.mrb[0].mxu0
    %2151 = vdwg.mxu0
    %v2152 = vmax.f32 %v2147, 0.0
    %v2153 = vpack.c.bf16 %v2152, %v2152
    %v2154 = vld [vmem:[#allocation7] sm:$0xf]
    %v2155 = vld [vmem:[#allocation7 + $0x4] sm:$0xf]
    %v2156 = vld [vmem:[#allocation7 + $0x8] sm:$0xf]
    %v2157 = vld [vmem:[#allocation7 + $0xc] sm:$0xf]
    %v2158 = vld [vmem:[#allocation7 + $0x10] sm:$0xf]
    %v2159 = vld [vmem:[#allocation7 + $0x14] sm:$0xf]
    %v2160 = vld [vmem:[#allocation7 + $0x18] sm:$0xf]
    %v2161 = vld [vmem:[#allocation7 + $0x1c] sm:$0xf]
    %v2162 = vld [vmem:[#allocation7 + $0x20] sm:$0xf]
    %v2163 = vld [vmem:[#allocation7 + $0x24] sm:$0xf]
    %v2164 = vld [vmem:[#allocation7 + $0x28] sm:$0xf]
    %v2165 = vld [vmem:[#allocation7 + $0x2c] sm:$0xf]
    %v2166 = vld [vmem:[#allocation7 + $0x30] sm:$0xf]
    %v2167 = vld [vmem:[#allocation7 + $0x34] sm:$0xf]
    %v2168 = vld [vmem:[#allocation7 + $0x38] sm:$0xf]
    %v2169 = vld [vmem:[#allocation7 + $0x3c] sm:$0xf]
    %v2170 = vld [vmem:[%s4] sm:$0x1]
    %v2172 = vlaneseq
    %v2173 = vshrl.u32 %v2172, 7
    %v2174 = vsub.s32 0, %v2173
    %v2175 = vrot.slane %v2170, %v2174
    %v2193 = vunpack.c.l.b16 %v2154
    %v2194 = vunpack.c.l.b16 %v2155
    %v2195 = vunpack.c.l.b16 %v2156
    %v2196 = vunpack.c.l.b16 %v2157
    %v2197 = vunpack.c.l.b16 %v2158
    %v2198 = vunpack.c.l.b16 %v2159
    %v2199 = vunpack.c.l.b16 %v2160
    %v2200 = vunpack.c.l.b16 %v2161
    %v2201 = vunpack.c.l.b16 %v2162
    %v2202 = vunpack.c.l.b16 %v2163
    %v2203 = vunpack.c.l.b16 %v2164
    %v2204 = vunpack.c.l.b16 %v2165
    %v2205 = vunpack.c.l.b16 %v2166
    %v2206 = vunpack.c.l.b16 %v2167
    %v2207 = vunpack.c.l.b16 %v2168
    %v2208 = vunpack.c.l.b16 %v2169
    %v2209 = vpack.c.b16 %v2194, %v2193
    %v2210 = vpack.c.b16 %v2196, %v2195
    %v2211 = vpack.c.b16 %v2198, %v2197
    %v2212 = vpack.c.b16 %v2200, %v2199
    %v2213 = vpack.c.b16 %v2202, %v2201
    %v2214 = vpack.c.b16 %v2204, %v2203
    %v2215 = vpack.c.b16 %v2206, %v2205
    %v2216 = vpack.c.b16 %v2208, %v2207
    %2225 = vmatprep.subr.bf16.mxu0 0
    %2226 = vmatpush1.bf16.msra.mxu0 %v2209
    %2227 = vmatprep.subr.bf16.mxu0 0
    %2228 = vmatpush1.bf16.msra.mxu0 %v2210
    %2229 = vmatprep.subr.bf16.mxu0 0
    %2230 = vmatpush1.bf16.msra.mxu0 %v2211
    %2231 = vmatprep.subr.bf16.mxu0 0
    %2232 = vmatpush1.bf16.msra.mxu0 %v2212
    %2233 = vmatprep.subr.bf16.mxu0 0
    %2234 = vmatpush1.bf16.msra.mxu0 %v2213
    %2235 = vmatprep.subr.bf16.mxu0 0
    %2236 = vmatpush1.bf16.msra.mxu0 %v2214
    %2237 = vmatprep.subr.bf16.mxu0 0
    %2238 = vmatpush1.bf16.msra.mxu0 %v2215
    %2239 = vmatprep.subr.bf16.mxu0 0
    %2240 = vmatpush1.bf16.msra.mxu0 %v2216
    %2241 = vmatprep.subr.bf16.mxu0 0
    %2242 = vmatpush1.bf16.msra.mxu0 0
    %2243 = vmatprep.subr.bf16.mxu0 0
    %2244 = vmatpush1.bf16.msra.mxu0 0
    %2245 = vmatprep.subr.bf16.mxu0 0
    %2246 = vmatpush1.bf16.msra.mxu0 0
    %2247 = vmatprep.subr.bf16.mxu0 0
    %2248 = vmatpush1.bf16.msra.mxu0 0
    %2249 = vmatprep.subr.bf16.mxu0 0
    %2250 = vmatpush1.bf16.msra.mxu0 0
    %2251 = vmatprep.subr.bf16.mxu0 0
    %2252 = vmatpush1.bf16.msra.mxu0 0
    %2253 = vmatprep.subr.bf16.mxu0 0
    %2254 = vmatpush1.bf16.msra.mxu0 0
    %2255 = vmatprep.subr.bf16.mxu0 0
    %2256 = vmatpush1.bf16.msra.mxu0 0
    %2257 = vmatprep.mubr.bf16.mxu0 0
    %2258 = vmatmul.mubr.bf16.gmra.mrb[0].mxu0 %v2153
    %v2259 = vpop.f32.mrb[0].mxu0
    %v2260 = vadd.f32 %v2175, %v2259
    %v2261 = vpop.f32.mrb[0].mxu0
    %v2262 = vpop.f32.mrb[0].mxu0
    %v2263 = vpop.f32.mrb[0].mxu0
    %2264 = vdwg.mxu0
    %v2265 = vmax.f32 %v2260, 0.0
    %v2266 = vpack.c.bf16 %v2265, %v2265
    %v2267 = vld [vmem:[#allocation8] sm:$0xf]
    %v2268 = vld [vmem:[#allocation8 + $0x4] sm:$0xf]
    %v2269 = vld [vmem:[#allocation8 + $0x8] sm:$0xf]
    %v2270 = vld [vmem:[#allocation8 + $0xc] sm:$0xf]
    %v2271 = vld [vmem:[#allocation8 + $0x10] sm:$0xf]
    %v2272 = vld [vmem:[#allocation8 + $0x14] sm:$0xf]
    %v2273 = vld [vmem:[#allocation8 + $0x18] sm:$0xf]
    %v2274 = vld [vmem:[#allocation8 + $0x1c] sm:$0xf]
    %v2275 = vld [vmem:[#allocation8 + $0x20] sm:$0xf]
    %v2276 = vld [vmem:[#allocation8 + $0x24] sm:$0xf]
    %v2277 = vld [vmem:[#allocation8 + $0x28] sm:$0xf]
    %v2278 = vld [vmem:[#allocation8 + $0x2c] sm:$0xf]
    %v2279 = vld [vmem:[#allocation8 + $0x30] sm:$0xf]
    %v2280 = vld [vmem:[#allocation8 + $0x34] sm:$0xf]
    %v2281 = vld [vmem:[#allocation8 + $0x38] sm:$0xf]
    %v2282 = vld [vmem:[#allocation8 + $0x3c] sm:$0xf]
    %v2283 = vld [vmem:[%s6] sm:$0x1]
    %v2285 = vlaneseq
    %v2286 = vshrl.u32 %v2285, 7
    %v2287 = vsub.s32 0, %v2286
    %v2288 = vrot.slane %v2283, %v2287
    %v2306 = vunpack.c.l.b16 %v2267
    %v2307 = vunpack.c.l.b16 %v2268
    %v2308 = vunpack.c.l.b16 %v2269
    %v2309 = vunpack.c.l.b16 %v2270
    %v2310 = vunpack.c.l.b16 %v2271
    %v2311 = vunpack.c.l.b16 %v2272
    %v2312 = vunpack.c.l.b16 %v2273
    %v2313 = vunpack.c.l.b16 %v2274
    %v2314 = vunpack.c.l.b16 %v2275
    %v2315 = vunpack.c.l.b16 %v2276
    %v2316 = vunpack.c.l.b16 %v2277
    %v2317 = vunpack.c.l.b16 %v2278
    %v2318 = vunpack.c.l.b16 %v2279
    %v2319 = vunpack.c.l.b16 %v2280
    %v2320 = vunpack.c.l.b16 %v2281
    %v2321 = vunpack.c.l.b16 %v2282
    %v2322 = vpack.c.b16 %v2307, %v2306
    %v2323 = vpack.c.b16 %v2309, %v2308
    %v2324 = vpack.c.b16 %v2311, %v2310
    %v2325 = vpack.c.b16 %v2313, %v2312
    %v2326 = vpack.c.b16 %v2315, %v2314
    %v2327 = vpack.c.b16 %v2317, %v2316
    %v2328 = vpack.c.b16 %v2319, %v2318
    %v2329 = vpack.c.b16 %v2321, %v2320
    %2338 = vmatprep.subr.bf16.mxu0 0
    %2339 = vmatpush1.bf16.msra.mxu0 %v2322
    %2340 = vmatprep.subr.bf16.mxu0 0
    %2341 = vmatpush1.bf16.msra.mxu0 %v2323
    %2342 = vmatprep.subr.bf16.mxu0 0
    %2343 = vmatpush1.bf16.msra.mxu0 %v2324
    %2344 = vmatprep.subr.bf16.mxu0 0
    %2345 = vmatpush1.bf16.msra.mxu0 %v2325
    %2346 = vmatprep.subr.bf16.mxu0 0
    %2347 = vmatpush1.bf16.msra.mxu0 %v2326
    %2348 = vmatprep.subr.bf16.mxu0 0
    %2349 = vmatpush1.bf16.msra.mxu0 %v2327
    %2350 = vmatprep.subr.bf16.mxu0 0
    %2351 = vmatpush1.bf16.msra.mxu0 %v2328
    %2352 = vmatprep.subr.bf16.mxu0 0
    %2353 = vmatpush1.bf16.msra.mxu0 %v2329
    %2354 = vmatprep.subr.bf16.mxu0 0
    %2355 = vmatpush1.bf16.msra.mxu0 0
    %2356 = vmatprep.subr.bf16.mxu0 0
    %2357 = vmatpush1.bf16.msra.mxu0 0
    %2358 = vmatprep.subr.bf16.mxu0 0
    %2359 = vmatpush1.bf16.msra.mxu0 0
    %2360 = vmatprep.subr.bf16.mxu0 0
    %2361 = vmatpush1.bf16.msra.mxu0 0
    %2362 = vmatprep.subr.bf16.mxu0 0
    %2363 = vmatpush1.bf16.msra.mxu0 0
    %2364 = vmatprep.subr.bf16.mxu0 0
    %2365 = vmatpush1.bf16.msra.mxu0 0
    %2366 = vmatprep.subr.bf16.mxu0 0
    %2367 = vmatpush1.bf16.msra.mxu0 0
    %2368 = vmatprep.subr.bf16.mxu0 0
    %2369 = vmatpush1.bf16.msra.mxu0 0
    %2370 = vmatprep.mubr.bf16.mxu0 0
    %2371 = vmatmul.mubr.bf16.gmra.mrb[0].mxu0 %v2266
    %v2372 = vpop.f32.mrb[0].mxu0
    %v2373 = vadd.f32 %v2288, %v2372
    %v2374 = vpop.f32.mrb[0].mxu0
    %v2375 = vpop.f32.mrb[0].mxu0
    %v2376 = vpop.f32.mrb[0].mxu0
    %2377 = vdwg.mxu0
    %v2378 = vpack.c.bf16 %v2373, %v2373
    %2379 = vst [vmem:[#allocation10] sm:$0xf] %v2378
    // Predicated region
    $region46: #{tpu_custom_call.1} parent=1 // pred_check
      _
    $region47: #{tpu_custom_call.1} parent=1 // pred_check_branch
      %2381 = sbr.rel (0) target = $region49
    $region48: #{tpu_custom_call.1} parent=1 // pred_region
      %s2383 = ssub.s32 64, 64
      %2384 = vsyncadd [#allocation4], %s2383
      %s2386 = sshll.u32 [#allocation10], 4
      %s2387 = int_to_ptr.vmem [resolvable:$true] %s2386
      %2389 = dma.vmem_to_hbm [thread:$0]  %s2387, 64, %s7, [#allocation4]
    $region49: #{tpu_custom_call.1} parent=1 // pred_fallthru
      _
    // Predicated region
    $region50: #{tpu_custom_call.1} parent=1 // pred_check
      _
    $region51: #{tpu_custom_call.1} parent=1 // pred_check_branch
      %2391 = sbr.rel (0) target = $region53
    $region52: #{tpu_custom_call.1} parent=1 // pred_region
      %2392 = dma.done [#allocation4], 64
    $region53: #{tpu_custom_call.1} parent=1 // pred_fallthru
      _
    %2393 = vsyncpa [#allocation3], 1
    %2394 = vsyncpa [#allocation6], 1
    %2395 = vsyncpa [#allocation9], 1
    %2396 = vsyncpa [#allocation4], 1

</llo_original>
